<compile_context>
chip_gen: v6e
topology: v6e:2x2x1
jax: 0.10.0
libtpu: 0.0.40
codegen_flags: <defaults>
</compile_context>

<pallas_src>
import math

import jax
import jax.numpy as jnp
from jax.experimental import pallas as pl
from jax.experimental.pallas import tpu as pltpu

_EPS = 1e-12
_EPS2 = _EPS * _EPS
_ONES_ROWS = 8  # sublane-aligned ones block for the W sum-of-squares matmul


def _cosine_linear_kernel(sigma_ref, x_ref, w_ref, o_ref, acc_ref, xss_ref, wss_ref):
    # sigma_ref: SMEM (1,)               scalar gain
    # x_ref:     VMEM (tm, tk)           input tile
    # w_ref:     VMEM (tn, tk)           weight tile
    # o_ref:     VMEM (tm, tn)           output tile (resident across k)
    # acc_ref:   VMEM (tm, tn) f32       raw-dot accumulator
    # xss_ref:   VMEM (tm, 1)  f32       per-row sum(x^2)  (computed once per i, at j==0)
    # wss_ref:   VMEM (8, tn)  f32       per-row sum(W^2), lane layout (rows identical)
    j = pl.program_id(1)
    k = pl.program_id(2)

    # Full f32 fidelity for float32 inputs; bf16 runs native on the MXU.
    prec = jax.lax.Precision.HIGHEST if x_ref.dtype == jnp.float32 else None

    @pl.when(k == 0)
    def _init():
        acc_ref[...] = jnp.zeros_like(acc_ref)
        wss_ref[...] = jnp.zeros_like(wss_ref)

    @pl.when(jnp.logical_and(j == 0, k == 0))
    def _init_x():
        xss_ref[...] = jnp.zeros_like(xss_ref)

    x = x_ref[...]  # (tm, tk) native dtype
    w = w_ref[...]  # (tn, tk) native dtype

    # Raw dot product on the MXU, accumulated in f32.
    acc_ref[...] += jax.lax.dot_general(
        x, w,
        dimension_numbers=(((1,), (1,)), ((), ())),
        preferred_element_type=jnp.float32,
        precision=prec,
    )

    # Per-row sum(x^2) -> (tm, 1). Only on the first j sweep: the scratch persists
    # across j for the same i (j/k are "arbitrary" axes; only i is megacore-parallel,
    # so any core visiting (i, j>0) has already executed (i, j=0)).
    @pl.when(j == 0)
    def _accum_xss():
        xf = x.astype(jnp.float32)
        xss_ref[...] += jnp.sum(xf * xf, axis=1, keepdims=True)

    # Per-row sum(W^2) produced directly in lane layout via a ones-block matmul
    # (MXU cost ~8/tm of the main matmul; no transpose needed at finalize).
    wf = w.astype(jnp.float32)
    w2 = wf * wf
    ones_blk = jnp.ones((_ONES_ROWS, w2.shape[1]), dtype=jnp.float32)
    wss_ref[...] += jax.lax.dot_general(
        ones_blk, w2,
        dimension_numbers=(((1,), (1,)), ((), ())),
        preferred_element_type=jnp.float32,
        precision=jax.lax.Precision.HIGHEST,
    )

    @pl.when(k == pl.num_programs(2) - 1)
    def _finalize():
        inv_x = jax.lax.rsqrt(jnp.maximum(xss_ref[...], _EPS2))      # (tm, 1)
        inv_w = jax.lax.rsqrt(jnp.maximum(wss_ref[0:1, :], _EPS2))   # (1, tn)
        row_scale = inv_x * sigma_ref[0]                              # (tm, 1)
        o_ref[...] = (acc_ref[...] * row_scale * inv_w).astype(o_ref.dtype)


def _round_up(n, m):
    return ((n + m - 1) // m) * m


def _pick_tile(dim, align, cap):
    """Pick a tile size (multiple of `align`, <= cap) that minimizes zero padding.

    Ties resolve toward the largest tile (fewer grid steps).
    Returns (tile, padded_dim).
    """
    dim_a = _round_up(dim, align)
    cap = max(align, (cap // align) * align)
    if dim_a <= cap:
        return dim_a, dim_a
    best_t, best_pad = None, None
    t = cap
    while t >= align:
        padded = _round_up(dim_a, t)
        if best_pad is None or padded < best_pad:
            best_t, best_pad = t, padded
        t -= align
    return best_t, best_pad


def cosine_linear(x, weight, sigma, *, tm=None, tn=None, tk=None):
    """x: (B, D), weight: (O, D), sigma: (1,) f32 -> (B, O)."""
    B, D = x.shape
    O, D2 = weight.shape
    assert D == D2, "feature dims must match"

    # Tile sizes: multiples of the (8, 128) vreg tile, capped so double-buffered
    # tiles + accumulator stay well inside the default scoped VMEM on v5e/v6e/v7x.
    if tm is None:
        tm, Bp = _pick_tile(B, 8, 256)
    else:
        Bp = _round_up(B, tm)
    if tn is None:
        tn, Op = _pick_tile(O, 128, 256)
    else:
        Op = _round_up(O, tn)
    if tk is None:
        tk, Dp = _pick_tile(D, 128, 512)
    else:
        Dp = _round_up(D, tk)

    # Zero padding: padded rows/cols produce exactly-zero dot products and zero
    # sums-of-squares, so the rsqrt(max(., eps^2)) scaling stays finite; padded
    # outputs are sliced away at the end.
    xp = x if (Bp == B and Dp == D) else jnp.pad(x, ((0, Bp - B), (0, Dp - D)))
    wp = weight if (Op == O and Dp == D) else jnp.pad(weight, ((0, Op - O), (0, Dp - D)))

    sigma = jnp.asarray(sigma, dtype=jnp.float32).reshape((1,))

    grid = (Bp // tm, Op // tn, Dp // tk)
    out_dtype = x.dtype

    in_itemsize = jnp.dtype(xp.dtype).itemsize
    cost = pl.CostEstimate(
        flops=2 * Bp * Op * Dp,
        transcendentals=Bp + Op,
        bytes_accessed=(Bp * Dp + Op * Dp) * in_itemsize
        + Bp * Op * jnp.dtype(out_dtype).itemsize,
    )

    out_p = pl.pallas_call(
        _cosine_linear_kernel,
        out_shape=jax.ShapeDtypeStruct((Bp, Op), out_dtype),
        grid_spec=pltpu.PrefetchScalarGridSpec(
            num_scalar_prefetch=0,
            grid=grid,
            in_specs=[
                pl.BlockSpec(memory_space=pltpu.SMEM),              # sigma scalar
                pl.BlockSpec((tm, tk), lambda i, j, k: (i, k)),     # x tile
                pl.BlockSpec((tn, tk), lambda i, j, k: (j, k)),     # W tile
            ],
            out_specs=pl.BlockSpec((tm, tn), lambda i, j, k: (i, j)),
            scratch_shapes=[
                pltpu.VMEM((tm, tn), jnp.float32),          # accumulator
                pltpu.VMEM((tm, 1), jnp.float32),           # sum(x^2) per row
                pltpu.VMEM((_ONES_ROWS, tn), jnp.float32),  # sum(W^2) per row (lane layout)
            ],
        ),
        # Only the batch axis is parallel (megacore); j/k must stay sequential so the
        # xss scratch computed at j==0 is valid for j>0 of the same batch tile.
        compiler_params=pltpu.CompilerParams(
            dimension_semantics=("parallel", "arbitrary", "arbitrary"),
        ),
        cost_estimate=cost,
    )(sigma, xp, wp)

    return out_p[:B, :O]


def _reference(x, weight, sigma):
    xn = x / jnp.maximum(jnp.linalg.norm(x, axis=1, keepdims=True), _EPS)
    wn = weight / jnp.maximum(jnp.linalg.norm(weight, axis=1, keepdims=True), _EPS)
    return (xn @ wn.T) * sigma[0]


if __name__ == "__main__":
    in_features = 32
    out_features = 16
    batch = 8

    key = jax.random.PRNGKey(0)
    kx, kw = jax.random.split(key)

    # Deterministic parameter init matching reset_parameters():
    #   weight ~ U(-stdv, stdv), stdv = 1/sqrt(in_features);  sigma = 1.
    stdv = 1.0 / math.sqrt(in_features)
    weight = jax.random.uniform(
        kw, (out_features, in_features), minval=-stdv, maxval=stdv, dtype=jnp.float32
    )
    sigma = jnp.ones((1,), dtype=jnp.float32)

    x = jax.random.normal(kx, (batch, in_features), dtype=jnp.float32)

    out = cosine_linear(x, weight, sigma)
    out = jax.block_until_ready(out)

    ref = _reference(x, weight, sigma)
    assert out.shape == (batch, out_features)
    assert jnp.allclose(out, ref, atol=1e-4, rtol=1e-4), "mismatch vs reference"

    print("KERNEL_OK")
</pallas_src>

<mosaic_0001>
module attributes {stable_mosaic.version = 11 : i64} {
  func.func @_cosine_linear_kernel(%arg0: i32, %arg1: i32, %arg2: i32, %arg3: memref<1xf32, #tpu.memory_space<smem>>, %arg4: memref<8x128xf32, #tpu.memory_space<vmem>>, %arg5: memref<128x128xf32, #tpu.memory_space<vmem>>, %arg6: memref<8x128xf32, #tpu.memory_space<vmem>>, %arg7: memref<8x128xf32, #tpu.memory_space<vmem>>, %arg8: memref<8x1xf32, #tpu.memory_space<vmem>>, %arg9: memref<8x128xf32, #tpu.memory_space<vmem>>) attributes {dimension_semantics = [#tpu.dimension_semantics<parallel>, #tpu.dimension_semantics<arbitrary>, #tpu.dimension_semantics<arbitrary>], iteration_bounds = array<i64: 1, 1, 1>, scalar_prefetch = 0 : i64, scratch_operands = 3 : i64, tpu.core_type = #tpu.core_type<tc>, window_params = [{transform_indices = @transform_0, window_bounds = array<i64: 1>}, {transform_indices = @transform_1, window_bounds = array<i64: 8, 128>}, {transform_indices = @transform_2, window_bounds = array<i64: 128, 128>}, {transform_indices = @transform_3, window_bounds = array<i64: 8, 128>}]} {
    %c0_i32 = arith.constant 0 : i32
    %0 = arith.cmpi eq, %arg2, %c0_i32 : i32
    %1 = arith.extui %0 : i1 to i32
    %c0_i32_0 = arith.constant 0 : i32
    %2 = arith.cmpi ne, %1, %c0_i32_0 : i32
    scf.if %2 {
      %cst_21 = arith.constant 0.000000e+00 : f32
      %26 = vector.broadcast %cst_21 : f32 to vector<8x128xf32>
      %c0_22 = arith.constant 0 : index
      %c0_23 = arith.constant 0 : index
      %27 = vector.load %arg7[%c0_22, %c0_23] : memref<8x128xf32, #tpu.memory_space<vmem>>, vector<8x128xf32>
      tpu.vector_store %arg7[%c0_22, %c0_23], %26 {strides = array<i32>} : memref<8x128xf32, #tpu.memory_space<vmem>>, vector<8x128xf32>,
      %cst_24 = arith.constant 0.000000e+00 : f32
      %28 = vector.broadcast %cst_24 : f32 to vector<8x128xf32>
      %c0_25 = arith.constant 0 : index
      %c0_26 = arith.constant 0 : index
      %29 = vector.load %arg9[%c0_25, %c0_26] : memref<8x128xf32, #tpu.memory_space<vmem>>, vector<8x128xf32>
      tpu.vector_store %arg9[%c0_25, %c0_26], %28 {strides = array<i32>} : memref<8x128xf32, #tpu.memory_space<vmem>>, vector<8x128xf32>,
    } else {
    }
    %c0_i32_1 = arith.constant 0 : i32
    %3 = arith.cmpi eq, %arg1, %c0_i32_1 : i32
    %c0_i32_2 = arith.constant 0 : i32
    %4 = arith.cmpi eq, %arg2, %c0_i32_2 : i32
    %5 = arith.andi %3, %4 : i1
    %6 = arith.extui %5 : i1 to i32
    %c0_i32_3 = arith.constant 0 : i32
    %7 = arith.cmpi ne, %6, %c0_i32_3 : i32
    scf.if %7 {
      %cst_21 = arith.constant 0.000000e+00 : f32
      %26 = vector.broadcast %cst_21 : f32 to vector<8x1xf32>
      %c0_22 = arith.constant 0 : index
      %c0_23 = arith.constant 0 : index
      %27 = vector.load %arg8[%c0_22, %c0_23] : memref<8x1xf32, #tpu.memory_space<vmem>>, vector<8x1xf32>
      tpu.vector_store %arg8[%c0_22, %c0_23], %26 {strides = array<i32>} : memref<8x1xf32, #tpu.memory_space<vmem>>, vector<8x1xf32>,
    } else {
    }
    %c0 = arith.constant 0 : index
    %c0_4 = arith.constant 0 : index
    %8 = vector.load %arg4[%c0, %c0_4] : memref<8x128xf32, #tpu.memory_space<vmem>>, vector<8x128xf32>
    %c0_5 = arith.constant 0 : index
    %c0_6 = arith.constant 0 : index
    %9 = vector.load %arg5[%c0_5, %c0_6] : memref<128x128xf32, #tpu.memory_space<vmem>>, vector<128x128xf32>
    %c0_7 = arith.constant 0 : index
    %c0_8 = arith.constant 0 : index
    %10 = vector.load %arg7[%c0_7, %c0_8] : memref<8x128xf32, #tpu.memory_space<vmem>>, vector<8x128xf32>
    %cst = arith.constant dense<0.000000e+00> : vector<8x128xf32>
    %11 = tpu.matmul %8, %9, %cst {dimension_numbers = #tpu.dot_dimension_numbers<[1], [1], [0], [0], [0, 0, 1, 0], [], []>, precision = #tpu.contract_precision<fp32>} : vector<8x128xf32>, vector<128x128xf32>, vector<8x128xf32> -> vector<8x128xf32>
    %12 = arith.addf %10, %11 : vector<8x128xf32>
    %c0_9 = arith.constant 0 : index
    %c0_10 = arith.constant 0 : index
    %13 = vector.load %arg7[%c0_9, %c0_10] : memref<8x128xf32, #tpu.memory_space<vmem>>, vector<8x128xf32>
    tpu.vector_store %arg7[%c0_9, %c0_10], %12 {strides = array<i32>} : memref<8x128xf32, #tpu.memory_space<vmem>>, vector<8x128xf32>,
    %c0_i32_11 = arith.constant 0 : i32
    %14 = arith.cmpi eq, %arg1, %c0_i32_11 : i32
    %15 = arith.extui %14 : i1 to i32
    %c0_i32_12 = arith.constant 0 : i32
    %16 = arith.cmpi ne, %15, %c0_i32_12 : i32
    scf.if %16 {
      %c0_21 = arith.constant 0 : index
      %c0_22 = arith.constant 0 : index
      %26 = vector.load %arg8[%c0_21, %c0_22] : memref<8x1xf32, #tpu.memory_space<vmem>>, vector<8x1xf32>
      %27 = arith.mulf %8, %8 : vector<8x128xf32>
      %cst_23 = arith.constant dense<0.000000e+00> : vector<8xf32>
      %28 = vector.multi_reduction <add>, %27, %cst_23 [1] : vector<8x128xf32> to vector<8xf32>
      %29 = vector.shape_cast %28 : vector<8xf32> to vector<8x1xf32>
      %30 = arith.addf %26, %29 : vector<8x1xf32>
      %c0_24 = arith.constant 0 : index
      %c0_25 = arith.constant 0 : index
      %31 = vector.load %arg8[%c0_24, %c0_25] : memref<8x1xf32, #tpu.memory_space<vmem>>, vector<8x1xf32>
      tpu.vector_store %arg8[%c0_24, %c0_25], %30 {strides = array<i32>} : memref<8x1xf32, #tpu.memory_space<vmem>>, vector<8x1xf32>,
    } else {
    }
    %17 = arith.mulf %9, %9 : vector<128x128xf32>
    %cst_13 = arith.constant 1.000000e+00 : f32
    %18 = vector.broadcast %cst_13 : f32 to vector<8x128xf32>
    %c0_14 = arith.constant 0 : index
    %c0_15 = arith.constant 0 : index
    %19 = vector.load %arg9[%c0_14, %c0_15] : memref<8x128xf32, #tpu.memory_space<vmem>>, vector<8x128xf32>
    %cst_16 = arith.constant dense<0.000000e+00> : vector<8x128xf32>
    %20 = tpu.matmul %18, %17, %cst_16 {dimension_numbers = #tpu.dot_dimension_numbers<[1], [1], [0], [0], [0, 0, 1, 0], [], []>, precision = #tpu.contract_precision<fp32>} : vector<8x128xf32>, vector<128x128xf32>, vector<8x128xf32> -> vector<8x128xf32>
    %21 = arith.addf %19, %20 : vector<8x128xf32>
    %c0_17 = arith.constant 0 : index
    %c0_18 = arith.constant 0 : index
    %22 = vector.load %arg9[%c0_17, %c0_18] : memref<8x128xf32, #tpu.memory_space<vmem>>, vector<8x128xf32>
    tpu.vector_store %arg9[%c0_17, %c0_18], %21 {strides = array<i32>} : memref<8x128xf32, #tpu.memory_space<vmem>>, vector<8x128xf32>,
    %c0_i32_19 = arith.constant 0 : i32
    %23 = arith.cmpi eq, %arg2, %c0_i32_19 : i32
    %24 = arith.extui %23 : i1 to i32
    %c0_i32_20 = arith.constant 0 : i32
    %25 = arith.cmpi ne, %24, %c0_i32_20 : i32
    scf.if %25 {
      %c0_21 = arith.constant 0 : index
      %c0_22 = arith.constant 0 : index
      %26 = vector.load %arg8[%c0_21, %c0_22] : memref<8x1xf32, #tpu.memory_space<vmem>>, vector<8x1xf32>
      %cst_23 = arith.constant 1.000000e-24 : f32
      %27 = vector.broadcast %cst_23 : f32 to vector<8x1xf32>
      %28 = arith.maximumf %26, %27 : vector<8x1xf32>
      %29 = math.rsqrt %28 : vector<8x1xf32>
      %c0_24 = arith.constant 0 : index
      %c0_25 = arith.constant 0 : index
      %30 = vector.load %arg9[%c0_24, %c0_25] : memref<8x128xf32, #tpu.memory_space<vmem>>, vector<1x128xf32>
      %cst_26 = arith.constant 1.000000e-24 : f32
      %31 = vector.broadcast %cst_26 : f32 to vector<1x128xf32>
      %32 = arith.maximumf %30, %31 : vector<1x128xf32>
      %33 = math.rsqrt %32 : vector<1x128xf32>
      %c0_27 = arith.constant 0 : index
      %34 = memref.load %arg3[%c0_27] : memref<1xf32, #tpu.memory_space<smem>>
      %35 = vector.broadcast %34 : f32 to vector<8x1xf32>
      %36 = arith.mulf %29, %35 : vector<8x1xf32>
      %c0_28 = arith.constant 0 : index
      %c0_29 = arith.constant 0 : index
      %37 = vector.load %arg7[%c0_28, %c0_29] : memref<8x128xf32, #tpu.memory_space<vmem>>, vector<8x128xf32>
      %38 = vector.broadcast %36 : vector<8x1xf32> to vector<8x128xf32>
      %39 = arith.mulf %37, %38 : vector<8x128xf32>
      %40 = vector.broadcast %33 : vector<1x128xf32> to vector<8x128xf32>
      %41 = arith.mulf %39, %40 : vector<8x128xf32>
      %c0_30 = arith.constant 0 : index
      %c0_31 = arith.constant 0 : index
      %42 = vector.load %arg6[%c0_30, %c0_31] : memref<8x128xf32, #tpu.memory_space<vmem>>, vector<8x128xf32>
      tpu.vector_store %arg6[%c0_30, %c0_31], %41 {strides = array<i32>} : memref<8x128xf32, #tpu.memory_space<vmem>>, vector<8x128xf32>,
    } else {
    }
    return
  }
  func.func @transform_0(%arg0: i32, %arg1: i32, %arg2: i32) -> i32 {
    %c0_i32 = arith.constant 0 : i32
    %c0_i32_0 = arith.constant 0 : i32
    return %c0_i32 : i32
  }
  func.func @transform_1(%arg0: i32, %arg1: i32, %arg2: i32) -> (i32, i32) {
    %c0_i32 = arith.constant 0 : i32
    return %arg0, %arg2 : i32, i32
  }
  func.func @transform_2(%arg0: i32, %arg1: i32, %arg2: i32) -> (i32, i32) {
    %c0_i32 = arith.constant 0 : i32
    return %arg1, %arg2 : i32, i32
  }
  func.func @transform_3(%arg0: i32, %arg1: i32, %arg2: i32) -> (i32, i32) {
    %c0_i32 = arith.constant 0 : i32
    return %arg0, %arg1 : i32, i32
  }
}

</mosaic_0001>

<llo_original>
// kernel: tpu_custom_call.1
$region0: #{tpu_custom_call.1}
  #allocation0 [shape = 'u32[]', space=smem, size = 0x4, offset = 0x4, fixed_abs, tag = 'smem constant byte address 0x4 - core index']
  #allocation1 [shape = 'u32[144,128]{1,0:T(1,128)}', space=vmem, size = 0x12000, scoped, tag = 'internal scratch']
  #allocation2 [shape = 'f32[8,128]{1,0:T(8,128)}', space=vmem, size = 0x1000, scoped, tag = 'scratch operand']
  #allocation3 [shape = 'f32[8,1]{1,0:T(8,128)}', space=vmem, size = 0x1000, scoped, tag = 'scratch operand']
  #allocation4 [shape = 'f32[8,128]{1,0:T(8,128)}', space=vmem, size = 0x1000, scoped, tag = 'scratch operand']
  #allocation5 [shape = 'f32[1]{0:T(128)S(6)}', space=smem, size = 0x200, scoped, tag = 'scoped memory for tpu_custom_call.1']
  %s0 = inlined_call_operand.<no memory space> [shape: f32[1], index: 0, kind: input, shape index: {}]
  %s1 = inlined_call_operand.hbm [shape: f32[8,128], index: 1, kind: input, shape index: {}]
  %s2 = inlined_call_operand.hbm [shape: f32[128,128], index: 2, kind: input, shape index: {}]
  %s3 = inlined_call_operand.hbm [shape: f32[8,128], index: 3, kind: output, shape index: {}]
  %s4 = sld [smem:[#allocation0]]
  $region46: #{tpu_custom_call.1} parent=0
    _
  %s6 = ssub.s32 1, %s4
  %s7 = scalar_select 0, %s6, %s4
  %8 = sst [smem:[#allocation5]] %s0
  $region1: #{tpu_custom_call.1} parent=0
    #allocation6 [shape = 'u8[4096]{0}', space=vmem, size = 0x1000, scoped, tag = 'input window, operand 1, single buffered']
    #allocation7 [shape = 's32[1]{0}', space=sflag, size = 0x4, scoped, tag = 'scoped memory for tpu_custom_call.1']
    #allocation8 [shape = 's32[1]{0}', space=sflag, size = 0x4, scoped, tag = 'scoped memory for tpu_custom_call.1']
    #allocation9 [shape = 'u8[65536]{0}', space=vmem, size = 0x10000, scoped, tag = 'input window, operand 2, single buffered']
    #allocation10 [shape = 's32[1]{0}', space=sflag, size = 0x4, scoped, tag = 'scoped memory for tpu_custom_call.1']
    #allocation11 [shape = 'u8[4096]{0}', space=vmem, size = 0x1000, scoped, tag = 'output window, operand 0, single buffered']
    %9 = vsyncpa [#allocation7], 0
    %10 = vsyncpa [#allocation10], 0
    %11 = vsyncpa [#allocation8], 0
    // Predicated region
    $region2: #{tpu_custom_call.1} parent=1 // pred_check
      _
    $region3: #{tpu_custom_call.1} parent=1 // pred_check_branch
      %13 = sbr.rel (0) target = $region5
    $region4: #{tpu_custom_call.1} parent=1 // pred_region
      _
    $region5: #{tpu_custom_call.1} parent=1 // pred_fallthru
      _
    // Predicated region
    $region6: #{tpu_custom_call.1} parent=1 // pred_check
      _
    $region7: #{tpu_custom_call.1} parent=1 // pred_check_branch
      %15 = sbr.rel (0) target = $region9
    $region8: #{tpu_custom_call.1} parent=1 // pred_region
      %s17 = ssub.s32 128, 128
      %18 = vsyncadd [#allocation7], %s17
      %s20 = sshll.u32 [#allocation6], 4
      %s21 = int_to_ptr.vmem [resolvable:$true] %s20
      %23 = dma.hbm_to_vmem [thread:$0]  %s1, 128, %s21, [#allocation7]
    $region9: #{tpu_custom_call.1} parent=1 // pred_fallthru
      _
    // Predicated region
    $region10: #{tpu_custom_call.1} parent=1 // pred_check
      _
    $region11: #{tpu_custom_call.1} parent=1 // pred_check_branch
      %25 = sbr.rel (0) target = $region13
    $region12: #{tpu_custom_call.1} parent=1 // pred_region
      %s27 = ssub.s32 2048, 2048
      %28 = vsyncadd [#allocation10], %s27
      %s29 = sshll.u32 [#allocation9], 4
      %s30 = int_to_ptr.vmem [resolvable:$true] %s29
      %35 = dma.hbm_to_vmem [thread:$0]  %s2, 2048, %s30, [#allocation10], 128, 128, 8
    $region13: #{tpu_custom_call.1} parent=1 // pred_fallthru
      _
    // Predicated region
    $region14: #{tpu_custom_call.1} parent=1 // pred_check
      _
    $region15: #{tpu_custom_call.1} parent=1 // pred_check_branch
      %37 = sbr.rel (0) target = $region17
    $region16: #{tpu_custom_call.1} parent=1 // pred_region
      %38 = dma.done [#allocation7], 128
    $region17: #{tpu_custom_call.1} parent=1 // pred_fallthru
      _
    // Predicated region
    $region18: #{tpu_custom_call.1} parent=1 // pred_check
      _
    $region19: #{tpu_custom_call.1} parent=1 // pred_check_branch
      %40 = sbr.rel (0) target = $region21
    $region20: #{tpu_custom_call.1} parent=1 // pred_region
      %41 = dma.done [#allocation10], 2048
    $region21: #{tpu_custom_call.1} parent=1 // pred_fallthru
      _
    %p42 = scmp.eq.s32.totalorder 0, 0
    // Predicated region
    $region22: #{tpu_custom_call.1} parent=1 // pred_check
      %p43 = pneg %p42
    $region23: #{tpu_custom_call.1} parent=1 // pred_check_branch
      %45 = sbr.rel (%p43) target = $region25
    $region24: #{tpu_custom_call.1} parent=1 // pred_region
      %46 = vst [vmem:[#allocation2] sm:$0xff] 0.0
      %47 = vst [vmem:[#allocation4] sm:$0xff] 0.0
    $region25: #{tpu_custom_call.1} parent=1 // pred_fallthru
      _
    %p48 = scmp.eq.s32.totalorder 0, 0
    %p49 = pnand %p48, %p42
    %p50 = pneg %p49
    // Predicated region
    $region26: #{tpu_custom_call.1} parent=1 // pred_check
      _
    $region27: #{tpu_custom_call.1} parent=1 // pred_check_branch
      %52 = sbr.rel (%p49) target = $region29
    $region28: #{tpu_custom_call.1} parent=1 // pred_region
      %vm53 = vcmask 7168
      %54 = vst.msk [vmem:[#allocation3] sm:$0xff] %vm53, 0.0
    $region29: #{tpu_custom_call.1} parent=1 // pred_fallthru
      _
    %v55 = vld [vmem:[#allocation6] sm:$0xff]
    %v56 = vld [vmem:[#allocation9] sm:$0xff]
    %v57 = vld [vmem:[#allocation9 + $0x8] sm:$0xff]
    %v58 = vld [vmem:[#allocation9 + $0x10] sm:$0xff]
    %v59 = vld [vmem:[#allocation9 + $0x18] sm:$0xff]
    %v60 = vld [vmem:[#allocation9 + $0x20] sm:$0xff]
    %v61 = vld [vmem:[#allocation9 + $0x28] sm:$0xff]
    %v62 = vld [vmem:[#allocation9 + $0x30] sm:$0xff]
    %v63 = vld [vmem:[#allocation9 + $0x38] sm:$0xff]
    %v64 = vld [vmem:[#allocation9 + $0x40] sm:$0xff]
    %v65 = vld [vmem:[#allocation9 + $0x48] sm:$0xff]
    %v66 = vld [vmem:[#allocation9 + $0x50] sm:$0xff]
    %v67 = vld [vmem:[#allocation9 + $0x58] sm:$0xff]
    %v68 = vld [vmem:[#allocation9 + $0x60] sm:$0xff]
    %v69 = vld [vmem:[#allocation9 + $0x68] sm:$0xff]
    %v70 = vld [vmem:[#allocation9 + $0x70] sm:$0xff]
    %v71 = vld [vmem:[#allocation9 + $0x78] sm:$0xff]
    %v72 = vld [vmem:[#allocation2] sm:$0xff]
    %73 = vmatprep.subr.mxu0 0.0
    %v74 = vand.u32 %v71, 4294901760
    %75 = vmatpush1.xpose.msra.mxu0 %v74
    %76 = vmatprep.subr.mxu0 0.0
    %v77 = vand.u32 %v70, 4294901760
    %78 = vmatpush1.xpose.msra.mxu0 %v77
    %79 = vmatprep.subr.mxu0 0.0
    %v80 = vand.u32 %v69, 4294901760
    %81 = vmatpush1.xpose.msra.mxu0 %v80
    %82 = vmatprep.subr.mxu0 0.0
    %v83 = vand.u32 %v68, 4294901760
    %84 = vmatpush1.xpose.msra.mxu0 %v83
    %85 = vmatprep.subr.mxu0 0.0
    %v86 = vand.u32 %v67, 4294901760
    %87 = vmatpush1.xpose.msra.mxu0 %v86
    %88 = vmatprep.subr.mxu0 0.0
    %v89 = vand.u32 %v66, 4294901760
    %90 = vmatpush1.xpose.msra.mxu0 %v89
    %91 = vmatprep.subr.mxu0 0.0
    %v92 = vand.u32 %v65, 4294901760
    %93 = vmatpush1.xpose.msra.mxu0 %v92
    %94 = vmatprep.subr.mxu0 0.0
    %v95 = vand.u32 %v64, 4294901760
    %96 = vmatpush1.xpose.msra.mxu0 %v95
    %97 = vmatprep.subr.mxu0 0.0
    %v98 = vand.u32 %v63, 4294901760
    %99 = vmatpush1.xpose.msra.mxu0 %v98
    %100 = vmatprep.subr.mxu0 0.0
    %v101 = vand.u32 %v62, 4294901760
    %102 = vmatpush1.xpose.msra.mxu0 %v101
    %103 = vmatprep.subr.mxu0 0.0
    %v104 = vand.u32 %v61, 4294901760
    %105 = vmatpush1.xpose.msra.mxu0 %v104
    %106 = vmatprep.subr.mxu0 0.0
    %v107 = vand.u32 %v60, 4294901760
    %108 = vmatpush1.xpose.msra.mxu0 %v107
    %109 = vmatprep.subr.mxu0 0.0
    %v110 = vand.u32 %v59, 4294901760
    %111 = vmatpush1.xpose.msra.mxu0 %v110
    %112 = vmatprep.subr.mxu0 0.0
    %v113 = vand.u32 %v58, 4294901760
    %114 = vmatpush1.xpose.msra.mxu0 %v113
    %115 = vmatprep.subr.mxu0 0.0
    %v116 = vand.u32 %v57, 4294901760
    %117 = vmatpush1.xpose.msra.mxu0 %v116
    %118 = vmatprep.subr.mxu0 0.0
    %v119 = vand.u32 %v56, 4294901760
    %120 = vmatpush1.xpose.msra.mxu0 %v119
    %121 = vmatprep.subr.mxu0 0.0
    %122 = vmatpush2.xpose.msra.mxu0 0.0
    %123 = vmatprep.subr.mxu0 0.0
    %124 = vmatpush2.xpose.msra.mxu0 0.0
    %125 = vmatprep.subr.mxu0 0.0
    %126 = vmatpush2.xpose.msra.mxu0 0.0
    %127 = vmatprep.subr.mxu0 0.0
    %128 = vmatpush2.xpose.msra.mxu0 0.0
    %129 = vmatprep.subr.mxu0 0.0
    %130 = vmatpush2.xpose.msra.mxu0 0.0
    %131 = vmatprep.subr.mxu0 0.0
    %132 = vmatpush2.xpose.msra.mxu0 0.0
    %133 = vmatprep.subr.mxu0 0.0
    %134 = vmatpush2.xpose.msra.mxu0 0.0
    %135 = vmatprep.subr.mxu0 0.0
    %136 = vmatpush2.xpose.msra.mxu0 0.0
    %137 = vmatprep.subr.mxu0 0.0
    %138 = vmatpush2.xpose.msra.mxu0 0.0
    %139 = vmatprep.subr.mxu0 0.0
    %140 = vmatpush2.xpose.msra.mxu0 0.0
    %141 = vmatprep.subr.mxu0 0.0
    %142 = vmatpush2.xpose.msra.mxu0 0.0
    %143 = vmatprep.subr.mxu0 0.0
    %144 = vmatpush2.xpose.msra.mxu0 0.0
    %145 = vmatprep.subr.mxu0 0.0
    %146 = vmatpush2.xpose.msra.mxu0 0.0
    %147 = vmatprep.subr.mxu0 0.0
    %148 = vmatpush2.xpose.msra.mxu0 0.0
    %149 = vmatprep.subr.mxu0 0.0
    %150 = vmatpush2.xpose.msra.mxu0 0.0
    %151 = vmatprep.subr.mxu0 0.0
    %152 = vmatpush2.xpose.msra.mxu0 0.0
    %153 = vmatprep.mubr.f32.mxu0 0.0
    %v154 = vand.u32 %v55, 4294901760
    %v155 = vsub.f32 %v55, %v154
    %v156 = vand.u32 %v155, 4294901760
    %v157 = vsub.f32 %v155, %v156
    %v158 = vand.u32 %v157, 4294901760
    %159 = vmatmul.mubr.f32.gmra.mxu0 %v158
    %v160 = vpop.f32.mrf.mxu0
    %v161 = vadd.f32 0.0, %v160
    %v162 = vpop.f32.mrf.mxu0
    %163 = vdwg.mxu0
    %164 = vmatprep.subr.mxu0 0.0
    %v165 = vand.u32 %v71, 4294901760
    %v166 = vsub.f32 %v71, %v165
    %v167 = vand.u32 %v166, 4294901760
    %v168 = vsub.f32 %v166, %v167
    %v169 = vand.u32 %v168, 4294901760
    %170 = vmatpush1.xpose.msra.mxu0 %v169
    %171 = vmatprep.subr.mxu0 0.0
    %v172 = vand.u32 %v70, 4294901760
    %v173 = vsub.f32 %v70, %v172
    %v174 = vand.u32 %v173, 4294901760
    %v175 = vsub.f32 %v173, %v174
    %v176 = vand.u32 %v175, 4294901760
    %177 = vmatpush1.xpose.msra.mxu0 %v176
    %178 = vmatprep.subr.mxu0 0.0
    %v179 = vand.u32 %v69, 4294901760
    %v180 = vsub.f32 %v69, %v179
    %v181 = vand.u32 %v180, 4294901760
    %v182 = vsub.f32 %v180, %v181
    %v183 = vand.u32 %v182, 4294901760
    %184 = vmatpush1.xpose.msra.mxu0 %v183
    %185 = vmatprep.subr.mxu0 0.0
    %v186 = vand.u32 %v68, 4294901760
    %v187 = vsub.f32 %v68, %v186
    %v188 = vand.u32 %v187, 4294901760
    %v189 = vsub.f32 %v187, %v188
    %v190 = vand.u32 %v189, 4294901760
    %191 = vmatpush1.xpose.msra.mxu0 %v190
    %192 = vmatprep.subr.mxu0 0.0
    %v193 = vand.u32 %v67, 4294901760
    %v194 = vsub.f32 %v67, %v193
    %v195 = vand.u32 %v194, 4294901760
    %v196 = vsub.f32 %v194, %v195
    %v197 = vand.u32 %v196, 4294901760
    %198 = vmatpush1.xpose.msra.mxu0 %v197
    %199 = vmatprep.subr.mxu0 0.0
    %v200 = vand.u32 %v66, 4294901760
    %v201 = vsub.f32 %v66, %v200
    %v202 = vand.u32 %v201, 4294901760
    %v203 = vsub.f32 %v201, %v202
    %v204 = vand.u32 %v203, 4294901760
    %205 = vmatpush1.xpose.msra.mxu0 %v204
    %206 = vmatprep.subr.mxu0 0.0
    %v207 = vand.u32 %v65, 4294901760
    %v208 = vsub.f32 %v65, %v207
    %v209 = vand.u32 %v208, 4294901760
    %v210 = vsub.f32 %v208, %v209
    %v211 = vand.u32 %v210, 4294901760
    %212 = vmatpush1.xpose.msra.mxu0 %v211
    %213 = vmatprep.subr.mxu0 0.0
    %v214 = vand.u32 %v64, 4294901760
    %v215 = vsub.f32 %v64, %v214
    %v216 = vand.u32 %v215, 4294901760
    %v217 = vsub.f32 %v215, %v216
    %v218 = vand.u32 %v217, 4294901760
    %219 = vmatpush1.xpose.msra.mxu0 %v218
    %220 = vmatprep.subr.mxu0 0.0
    %v221 = vand.u32 %v63, 4294901760
    %v222 = vsub.f32 %v63, %v221
    %v223 = vand.u32 %v222, 4294901760
    %v224 = vsub.f32 %v222, %v223
    %v225 = vand.u32 %v224, 4294901760
    %226 = vmatpush1.xpose.msra.mxu0 %v225
    %227 = vmatprep.subr.mxu0 0.0
    %v228 = vand.u32 %v62, 4294901760
    %v229 = vsub.f32 %v62, %v228
    %v230 = vand.u32 %v229, 4294901760
    %v231 = vsub.f32 %v229, %v230
    %v232 = vand.u32 %v231, 4294901760
    %233 = vmatpush1.xpose.msra.mxu0 %v232
    %234 = vmatprep.subr.mxu0 0.0
    %v235 = vand.u32 %v61, 4294901760
    %v236 = vsub.f32 %v61, %v235
    %v237 = vand.u32 %v236, 4294901760
    %v238 = vsub.f32 %v236, %v237
    %v239 = vand.u32 %v238, 4294901760
    %240 = vmatpush1.xpose.msra.mxu0 %v239
    %241 = vmatprep.subr.mxu0 0.0
    %v242 = vand.u32 %v60, 4294901760
    %v243 = vsub.f32 %v60, %v242
    %v244 = vand.u32 %v243, 4294901760
    %v245 = vsub.f32 %v243, %v244
    %v246 = vand.u32 %v245, 4294901760
    %247 = vmatpush1.xpose.msra.mxu0 %v246
    %248 = vmatprep.subr.mxu0 0.0
    %v249 = vand.u32 %v59, 4294901760
    %v250 = vsub.f32 %v59, %v249
    %v251 = vand.u32 %v250, 4294901760
    %v252 = vsub.f32 %v250, %v251
    %v253 = vand.u32 %v252, 4294901760
    %254 = vmatpush1.xpose.msra.mxu0 %v253
    %255 = vmatprep.subr.mxu0 0.0
    %v256 = vand.u32 %v58, 4294901760
    %v257 = vsub.f32 %v58, %v256
    %v258 = vand.u32 %v257, 4294901760
    %v259 = vsub.f32 %v257, %v258
    %v260 = vand.u32 %v259, 4294901760
    %261 = vmatpush1.xpose.msra.mxu0 %v260
    %262 = vmatprep.subr.mxu0 0.0
    %v263 = vand.u32 %v57, 4294901760
    %v264 = vsub.f32 %v57, %v263
    %v265 = vand.u32 %v264, 4294901760
    %v266 = vsub.f32 %v264, %v265
    %v267 = vand.u32 %v266, 4294901760
    %268 = vmatpush1.xpose.msra.mxu0 %v267
    %269 = vmatprep.subr.mxu0 0.0
    %v270 = vand.u32 %v56, 4294901760
    %v271 = vsub.f32 %v56, %v270
    %v272 = vand.u32 %v271, 4294901760
    %v273 = vsub.f32 %v271, %v272
    %v274 = vand.u32 %v273, 4294901760
    %275 = vmatpush1.xpose.msra.mxu0 %v274
    %276 = vmatprep.subr.mxu0 0.0
    %277 = vmatpush2.xpose.msra.mxu0 0.0
    %278 = vmatprep.subr.mxu0 0.0
    %279 = vmatpush2.xpose.msra.mxu0 0.0
    %280 = vmatprep.subr.mxu0 0.0
    %281 = vmatpush2.xpose.msra.mxu0 0.0
    %282 = vmatprep.subr.mxu0 0.0
    %283 = vmatpush2.xpose.msra.mxu0 0.0
    %284 = vmatprep.subr.mxu0 0.0
    %285 = vmatpush2.xpose.msra.mxu0 0.0
    %286 = vmatprep.subr.mxu0 0.0
    %287 = vmatpush2.xpose.msra.mxu0 0.0
    %288 = vmatprep.subr.mxu0 0.0
    %289 = vmatpush2.xpose.msra.mxu0 0.0
    %290 = vmatprep.subr.mxu0 0.0
    %291 = vmatpush2.xpose.msra.mxu0 0.0
    %292 = vmatprep.subr.mxu0 0.0
    %293 = vmatpush2.xpose.msra.mxu0 0.0
    %294 = vmatprep.subr.mxu0 0.0
    %295 = vmatpush2.xpose.msra.mxu0 0.0
    %296 = vmatprep.subr.mxu0 0.0
    %297 = vmatpush2.xpose.msra.mxu0 0.0
    %298 = vmatprep.subr.mxu0 0.0
    %299 = vmatpush2.xpose.msra.mxu0 0.0
    %300 = vmatprep.subr.mxu0 0.0
    %301 = vmatpush2.xpose.msra.mxu0 0.0
    %302 = vmatprep.subr.mxu0 0.0
    %303 = vmatpush2.xpose.msra.mxu0 0.0
    %304 = vmatprep.subr.mxu0 0.0
    %305 = vmatpush2.xpose.msra.mxu0 0.0
    %306 = vmatprep.subr.mxu0 0.0
    %307 = vmatpush2.xpose.msra.mxu0 0.0
    %308 = vmatprep.mubr.f32.mxu0 0.0
    %v309 = vand.u32 %v55, 4294901760
    %310 = vmatmul.mubr.f32.gmra.mxu0 %v309
    %v311 = vpop.f32.mrf.mxu0
    %v312 = vadd.f32 %v161, %v311
    %v313 = vpop.f32.mrf.mxu0
    %314 = vdwg.mxu0
    %315 = vmatprep.subr.mxu0 0.0
    %v316 = vand.u32 %v71, 4294901760
    %v317 = vsub.f32 %v71, %v316
    %318 = vmatpush1.xpose.msra.mxu0 %v317
    %319 = vmatprep.subr.mxu0 0.0
    %v320 = vand.u32 %v70, 4294901760
    %v321 = vsub.f32 %v70, %v320
    %322 = vmatpush1.xpose.msra.mxu0 %v321
    %323 = vmatprep.subr.mxu0 0.0
    %v324 = vand.u32 %v69, 4294901760
    %v325 = vsub.f32 %v69, %v324
    %326 = vmatpush1.xpose.msra.mxu0 %v325
    %327 = vmatprep.subr.mxu0 0.0
    %v328 = vand.u32 %v68, 4294901760
    %v329 = vsub.f32 %v68, %v328
    %330 = vmatpush1.xpose.msra.mxu0 %v329
    %331 = vmatprep.subr.mxu0 0.0
    %v332 = vand.u32 %v67, 4294901760
    %v333 = vsub.f32 %v67, %v332
    %334 = vmatpush1.xpose.msra.mxu0 %v333
    %335 = vmatprep.subr.mxu0 0.0
    %v336 = vand.u32 %v66, 4294901760
    %v337 = vsub.f32 %v66, %v336
    %338 = vmatpush1.xpose.msra.mxu0 %v337
    %339 = vmatprep.subr.mxu0 0.0
    %v340 = vand.u32 %v65, 4294901760
    %v341 = vsub.f32 %v65, %v340
    %342 = vmatpush1.xpose.msra.mxu0 %v341
    %343 = vmatprep.subr.mxu0 0.0
    %v344 = vand.u32 %v64, 4294901760
    %v345 = vsub.f32 %v64, %v344
    %346 = vmatpush1.xpose.msra.mxu0 %v345
    %347 = vmatprep.subr.mxu0 0.0
    %v348 = vand.u32 %v63, 4294901760
    %v349 = vsub.f32 %v63, %v348
    %350 = vmatpush1.xpose.msra.mxu0 %v349
    %351 = vmatprep.subr.mxu0 0.0
    %v352 = vand.u32 %v62, 4294901760
    %v353 = vsub.f32 %v62, %v352
    %354 = vmatpush1.xpose.msra.mxu0 %v353
    %355 = vmatprep.subr.mxu0 0.0
    %v356 = vand.u32 %v61, 4294901760
    %v357 = vsub.f32 %v61, %v356
    %358 = vmatpush1.xpose.msra.mxu0 %v357
    %359 = vmatprep.subr.mxu0 0.0
    %v360 = vand.u32 %v60, 4294901760
    %v361 = vsub.f32 %v60, %v360
    %362 = vmatpush1.xpose.msra.mxu0 %v361
    %363 = vmatprep.subr.mxu0 0.0
    %v364 = vand.u32 %v59, 4294901760
    %v365 = vsub.f32 %v59, %v364
    %366 = vmatpush1.xpose.msra.mxu0 %v365
    %367 = vmatprep.subr.mxu0 0.0
    %v368 = vand.u32 %v58, 4294901760
    %v369 = vsub.f32 %v58, %v368
    %370 = vmatpush1.xpose.msra.mxu0 %v369
    %371 = vmatprep.subr.mxu0 0.0
    %v372 = vand.u32 %v57, 4294901760
    %v373 = vsub.f32 %v57, %v372
    %374 = vmatpush1.xpose.msra.mxu0 %v373
    %375 = vmatprep.subr.mxu0 0.0
    %v376 = vand.u32 %v56, 4294901760
    %v377 = vsub.f32 %v56, %v376
    %378 = vmatpush1.xpose.msra.mxu0 %v377
    %379 = vmatprep.subr.mxu0 0.0
    %380 = vmatpush2.xpose.msra.mxu0 0.0
    %381 = vmatprep.subr.mxu0 0.0
    %382 = vmatpush2.xpose.msra.mxu0 0.0
    %383 = vmatprep.subr.mxu0 0.0
    %384 = vmatpush2.xpose.msra.mxu0 0.0
    %385 = vmatprep.subr.mxu0 0.0
    %386 = vmatpush2.xpose.msra.mxu0 0.0
    %387 = vmatprep.subr.mxu0 0.0
    %388 = vmatpush2.xpose.msra.mxu0 0.0
    %389 = vmatprep.subr.mxu0 0.0
    %390 = vmatpush2.xpose.msra.mxu0 0.0
    %391 = vmatprep.subr.mxu0 0.0
    %392 = vmatpush2.xpose.msra.mxu0 0.0
    %393 = vmatprep.subr.mxu0 0.0
    %394 = vmatpush2.xpose.msra.mxu0 0.0
    %395 = vmatprep.subr.mxu0 0.0
    %396 = vmatpush2.xpose.msra.mxu0 0.0
    %397 = vmatprep.subr.mxu0 0.0
    %398 = vmatpush2.xpose.msra.mxu0 0.0
    %399 = vmatprep.subr.mxu0 0.0
    %400 = vmatpush2.xpose.msra.mxu0 0.0
    %401 = vmatprep.subr.mxu0 0.0
    %402 = vmatpush2.xpose.msra.mxu0 0.0
    %403 = vmatprep.subr.mxu0 0.0
    %404 = vmatpush2.xpose.msra.mxu0 0.0
    %405 = vmatprep.subr.mxu0 0.0
    %406 = vmatpush2.xpose.msra.mxu0 0.0
    %407 = vmatprep.subr.mxu0 0.0
    %408 = vmatpush2.xpose.msra.mxu0 0.0
    %409 = vmatprep.subr.mxu0 0.0
    %410 = vmatpush2.xpose.msra.mxu0 0.0
    %411 = vmatprep.mubr.f32.mxu0 0.0
    %v412 = vand.u32 %v55, 4294901760
    %v413 = vsub.f32 %v55, %v412
    %414 = vmatmul.mubr.f32.gmra.mxu0 %v413
    %v415 = vpop.f32.mrf.mxu0
    %v416 = vadd.f32 %v312, %v415
    %v417 = vpop.f32.mrf.mxu0
    %418 = vdwg.mxu0
    %419 = vmatprep.subr.mxu0 0.0
    %v420 = vand.u32 %v71, 4294901760
    %421 = vmatpush1.xpose.msra.mxu0 %v420
    %422 = vmatprep.subr.mxu0 0.0
    %v423 = vand.u32 %v70, 4294901760
    %424 = vmatpush1.xpose.msra.mxu0 %v423
    %425 = vmatprep.subr.mxu0 0.0
    %v426 = vand.u32 %v69, 4294901760
    %427 = vmatpush1.xpose.msra.mxu0 %v426
    %428 = vmatprep.subr.mxu0 0.0
    %v429 = vand.u32 %v68, 4294901760
    %430 = vmatpush1.xpose.msra.mxu0 %v429
    %431 = vmatprep.subr.mxu0 0.0
    %v432 = vand.u32 %v67, 4294901760
    %433 = vmatpush1.xpose.msra.mxu0 %v432
    %434 = vmatprep.subr.mxu0 0.0
    %v435 = vand.u32 %v66, 4294901760
    %436 = vmatpush1.xpose.msra.mxu0 %v435
    %437 = vmatprep.subr.mxu0 0.0
    %v438 = vand.u32 %v65, 4294901760
    %439 = vmatpush1.xpose.msra.mxu0 %v438
    %440 = vmatprep.subr.mxu0 0.0
    %v441 = vand.u32 %v64, 4294901760
    %442 = vmatpush1.xpose.msra.mxu0 %v441
    %443 = vmatprep.subr.mxu0 0.0
    %v444 = vand.u32 %v63, 4294901760
    %445 = vmatpush1.xpose.msra.mxu0 %v444
    %446 = vmatprep.subr.mxu0 0.0
    %v447 = vand.u32 %v62, 4294901760
    %448 = vmatpush1.xpose.msra.mxu0 %v447
    %449 = vmatprep.subr.mxu0 0.0
    %v450 = vand.u32 %v61, 4294901760
    %451 = vmatpush1.xpose.msra.mxu0 %v450
    %452 = vmatprep.subr.mxu0 0.0
    %v453 = vand.u32 %v60, 4294901760
    %454 = vmatpush1.xpose.msra.mxu0 %v453
    %455 = vmatprep.subr.mxu0 0.0
    %v456 = vand.u32 %v59, 4294901760
    %457 = vmatpush1.xpose.msra.mxu0 %v456
    %458 = vmatprep.subr.mxu0 0.0
    %v459 = vand.u32 %v58, 4294901760
    %460 = vmatpush1.xpose.msra.mxu0 %v459
    %461 = vmatprep.subr.mxu0 0.0
    %v462 = vand.u32 %v57, 4294901760
    %463 = vmatpush1.xpose.msra.mxu0 %v462
    %464 = vmatprep.subr.mxu0 0.0
    %v465 = vand.u32 %v56, 4294901760
    %466 = vmatpush1.xpose.msra.mxu0 %v465
    %467 = vmatprep.subr.mxu0 0.0
    %468 = vmatpush2.xpose.msra.mxu0 0.0
    %469 = vmatprep.subr.mxu0 0.0
    %470 = vmatpush2.xpose.msra.mxu0 0.0
    %471 = vmatprep.subr.mxu0 0.0
    %472 = vmatpush2.xpose.msra.mxu0 0.0
    %473 = vmatprep.subr.mxu0 0.0
    %474 = vmatpush2.xpose.msra.mxu0 0.0
    %475 = vmatprep.subr.mxu0 0.0
    %476 = vmatpush2.xpose.msra.mxu0 0.0
    %477 = vmatprep.subr.mxu0 0.0
    %478 = vmatpush2.xpose.msra.mxu0 0.0
    %479 = vmatprep.subr.mxu0 0.0
    %480 = vmatpush2.xpose.msra.mxu0 0.0
    %481 = vmatprep.subr.mxu0 0.0
    %482 = vmatpush2.xpose.msra.mxu0 0.0
    %483 = vmatprep.subr.mxu0 0.0
    %484 = vmatpush2.xpose.msra.mxu0 0.0
    %485 = vmatprep.subr.mxu0 0.0
    %486 = vmatpush2.xpose.msra.mxu0 0.0
    %487 = vmatprep.subr.mxu0 0.0
    %488 = vmatpush2.xpose.msra.mxu0 0.0
    %489 = vmatprep.subr.mxu0 0.0
    %490 = vmatpush2.xpose.msra.mxu0 0.0
    %491 = vmatprep.subr.mxu0 0.0
    %492 = vmatpush2.xpose.msra.mxu0 0.0
    %493 = vmatprep.subr.mxu0 0.0
    %494 = vmatpush2.xpose.msra.mxu0 0.0
    %495 = vmatprep.subr.mxu0 0.0
    %496 = vmatpush2.xpose.msra.mxu0 0.0
    %497 = vmatprep.subr.mxu0 0.0
    %498 = vmatpush2.xpose.msra.mxu0 0.0
    %499 = vmatprep.mubr.f32.mxu0 0.0
    %v500 = vand.u32 %v55, 4294901760
    %v501 = vsub.f32 %v55, %v500
    %v502 = vand.u32 %v501, 4294901760
    %503 = vmatmul.mubr.f32.gmra.mxu0 %v502
    %v504 = vpop.f32.mrf.mxu0
    %v505 = vadd.f32 %v416, %v504
    %v506 = vpop.f32.mrf.mxu0
    %507 = vdwg.mxu0
    %508 = vmatprep.subr.mxu0 0.0
    %v509 = vand.u32 %v71, 4294901760
    %v510 = vsub.f32 %v71, %v509
    %v511 = vand.u32 %v510, 4294901760
    %512 = vmatpush1.xpose.msra.mxu0 %v511
    %513 = vmatprep.subr.mxu0 0.0
    %v514 = vand.u32 %v70, 4294901760
    %v515 = vsub.f32 %v70, %v514
    %v516 = vand.u32 %v515, 4294901760
    %517 = vmatpush1.xpose.msra.mxu0 %v516
    %518 = vmatprep.subr.mxu0 0.0
    %v519 = vand.u32 %v69, 4294901760
    %v520 = vsub.f32 %v69, %v519
    %v521 = vand.u32 %v520, 4294901760
    %522 = vmatpush1.xpose.msra.mxu0 %v521
    %523 = vmatprep.subr.mxu0 0.0
    %v524 = vand.u32 %v68, 4294901760
    %v525 = vsub.f32 %v68, %v524
    %v526 = vand.u32 %v525, 4294901760
    %527 = vmatpush1.xpose.msra.mxu0 %v526
    %528 = vmatprep.subr.mxu0 0.0
    %v529 = vand.u32 %v67, 4294901760
    %v530 = vsub.f32 %v67, %v529
    %v531 = vand.u32 %v530, 4294901760
    %532 = vmatpush1.xpose.msra.mxu0 %v531
    %533 = vmatprep.subr.mxu0 0.0
    %v534 = vand.u32 %v66, 4294901760
    %v535 = vsub.f32 %v66, %v534
    %v536 = vand.u32 %v535, 4294901760
    %537 = vmatpush1.xpose.msra.mxu0 %v536
    %538 = vmatprep.subr.mxu0 0.0
    %v539 = vand.u32 %v65, 4294901760
    %v540 = vsub.f32 %v65, %v539
    %v541 = vand.u32 %v540, 4294901760
    %542 = vmatpush1.xpose.msra.mxu0 %v541
    %543 = vmatprep.subr.mxu0 0.0
    %v544 = vand.u32 %v64, 4294901760
    %v545 = vsub.f32 %v64, %v544
    %v546 = vand.u32 %v545, 4294901760
    %547 = vmatpush1.xpose.msra.mxu0 %v546
    %548 = vmatprep.subr.mxu0 0.0
    %v549 = vand.u32 %v63, 4294901760
    %v550 = vsub.f32 %v63, %v549
    %v551 = vand.u32 %v550, 4294901760
    %552 = vmatpush1.xpose.msra.mxu0 %v551
    %553 = vmatprep.subr.mxu0 0.0
    %v554 = vand.u32 %v62, 4294901760
    %v555 = vsub.f32 %v62, %v554
    %v556 = vand.u32 %v555, 4294901760
    %557 = vmatpush1.xpose.msra.mxu0 %v556
    %558 = vmatprep.subr.mxu0 0.0
    %v559 = vand.u32 %v61, 4294901760
    %v560 = vsub.f32 %v61, %v559
    %v561 = vand.u32 %v560, 4294901760
    %562 = vmatpush1.xpose.msra.mxu0 %v561
    %563 = vmatprep.subr.mxu0 0.0
    %v564 = vand.u32 %v60, 4294901760
    %v565 = vsub.f32 %v60, %v564
    %v566 = vand.u32 %v565, 4294901760
    %567 = vmatpush1.xpose.msra.mxu0 %v566
    %568 = vmatprep.subr.mxu0 0.0
    %v569 = vand.u32 %v59, 4294901760
    %v570 = vsub.f32 %v59, %v569
    %v571 = vand.u32 %v570, 4294901760
    %572 = vmatpush1.xpose.msra.mxu0 %v571
    %573 = vmatprep.subr.mxu0 0.0
    %v574 = vand.u32 %v58, 4294901760
    %v575 = vsub.f32 %v58, %v574
    %v576 = vand.u32 %v575, 4294901760
    %577 = vmatpush1.xpose.msra.mxu0 %v576
    %578 = vmatprep.subr.mxu0 0.0
    %v579 = vand.u32 %v57, 4294901760
    %v580 = vsub.f32 %v57, %v579
    %v581 = vand.u32 %v580, 4294901760
    %582 = vmatpush1.xpose.msra.mxu0 %v581
    %583 = vmatprep.subr.mxu0 0.0
    %v584 = vand.u32 %v56, 4294901760
    %v585 = vsub.f32 %v56, %v584
    %v586 = vand.u32 %v585, 4294901760
    %587 = vmatpush1.xpose.msra.mxu0 %v586
    %588 = vmatprep.subr.mxu0 0.0
    %589 = vmatpush2.xpose.msra.mxu0 0.0
    %590 = vmatprep.subr.mxu0 0.0
    %591 = vmatpush2.xpose.msra.mxu0 0.0
    %592 = vmatprep.subr.mxu0 0.0
    %593 = vmatpush2.xpose.msra.mxu0 0.0
    %594 = vmatprep.subr.mxu0 0.0
    %595 = vmatpush2.xpose.msra.mxu0 0.0
    %596 = vmatprep.subr.mxu0 0.0
    %597 = vmatpush2.xpose.msra.mxu0 0.0
    %598 = vmatprep.subr.mxu0 0.0
    %599 = vmatpush2.xpose.msra.mxu0 0.0
    %600 = vmatprep.subr.mxu0 0.0
    %601 = vmatpush2.xpose.msra.mxu0 0.0
    %602 = vmatprep.subr.mxu0 0.0
    %603 = vmatpush2.xpose.msra.mxu0 0.0
    %604 = vmatprep.subr.mxu0 0.0
    %605 = vmatpush2.xpose.msra.mxu0 0.0
    %606 = vmatprep.subr.mxu0 0.0
    %607 = vmatpush2.xpose.msra.mxu0 0.0
    %608 = vmatprep.subr.mxu0 0.0
    %609 = vmatpush2.xpose.msra.mxu0 0.0
    %610 = vmatprep.subr.mxu0 0.0
    %611 = vmatpush2.xpose.msra.mxu0 0.0
    %612 = vmatprep.subr.mxu0 0.0
    %613 = vmatpush2.xpose.msra.mxu0 0.0
    %614 = vmatprep.subr.mxu0 0.0
    %615 = vmatpush2.xpose.msra.mxu0 0.0
    %616 = vmatprep.subr.mxu0 0.0
    %617 = vmatpush2.xpose.msra.mxu0 0.0
    %618 = vmatprep.subr.mxu0 0.0
    %619 = vmatpush2.xpose.msra.mxu0 0.0
    %620 = vmatprep.mubr.f32.mxu0 0.0
    %v621 = vand.u32 %v55, 4294901760
    %622 = vmatmul.mubr.f32.gmra.mxu0 %v621
    %v623 = vpop.f32.mrf.mxu0
    %v624 = vadd.f32 %v505, %v623
    %v625 = vpop.f32.mrf.mxu0
    %626 = vdwg.mxu0
    %627 = vmatprep.subr.mxu0 0.0
    %v628 = vand.u32 %v71, 4294901760
    %629 = vmatpush1.xpose.msra.mxu0 %v628
    %630 = vmatprep.subr.mxu0 0.0
    %v631 = vand.u32 %v70, 4294901760
    %632 = vmatpush1.xpose.msra.mxu0 %v631
    %633 = vmatprep.subr.mxu0 0.0
    %v634 = vand.u32 %v69, 4294901760
    %635 = vmatpush1.xpose.msra.mxu0 %v634
    %636 = vmatprep.subr.mxu0 0.0
    %v637 = vand.u32 %v68, 4294901760
    %638 = vmatpush1.xpose.msra.mxu0 %v637
    %639 = vmatprep.subr.mxu0 0.0
    %v640 = vand.u32 %v67, 4294901760
    %641 = vmatpush1.xpose.msra.mxu0 %v640
    %642 = vmatprep.subr.mxu0 0.0
    %v643 = vand.u32 %v66, 4294901760
    %644 = vmatpush1.xpose.msra.mxu0 %v643
    %645 = vmatprep.subr.mxu0 0.0
    %v646 = vand.u32 %v65, 4294901760
    %647 = vmatpush1.xpose.msra.mxu0 %v646
    %648 = vmatprep.subr.mxu0 0.0
    %v649 = vand.u32 %v64, 4294901760
    %650 = vmatpush1.xpose.msra.mxu0 %v649
    %651 = vmatprep.subr.mxu0 0.0
    %v652 = vand.u32 %v63, 4294901760
    %653 = vmatpush1.xpose.msra.mxu0 %v652
    %654 = vmatprep.subr.mxu0 0.0
    %v655 = vand.u32 %v62, 4294901760
    %656 = vmatpush1.xpose.msra.mxu0 %v655
    %657 = vmatprep.subr.mxu0 0.0
    %v658 = vand.u32 %v61, 4294901760
    %659 = vmatpush1.xpose.msra.mxu0 %v658
    %660 = vmatprep.subr.mxu0 0.0
    %v661 = vand.u32 %v60, 4294901760
    %662 = vmatpush1.xpose.msra.mxu0 %v661
    %663 = vmatprep.subr.mxu0 0.0
    %v664 = vand.u32 %v59, 4294901760
    %665 = vmatpush1.xpose.msra.mxu0 %v664
    %666 = vmatprep.subr.mxu0 0.0
    %v667 = vand.u32 %v58, 4294901760
    %668 = vmatpush1.xpose.msra.mxu0 %v667
    %669 = vmatprep.subr.mxu0 0.0
    %v670 = vand.u32 %v57, 4294901760
    %671 = vmatpush1.xpose.msra.mxu0 %v670
    %672 = vmatprep.subr.mxu0 0.0
    %v673 = vand.u32 %v56, 4294901760
    %674 = vmatpush1.xpose.msra.mxu0 %v673
    %675 = vmatprep.subr.mxu0 0.0
    %676 = vmatpush2.xpose.msra.mxu0 0.0
    %677 = vmatprep.subr.mxu0 0.0
    %678 = vmatpush2.xpose.msra.mxu0 0.0
    %679 = vmatprep.subr.mxu0 0.0
    %680 = vmatpush2.xpose.msra.mxu0 0.0
    %681 = vmatprep.subr.mxu0 0.0
    %682 = vmatpush2.xpose.msra.mxu0 0.0
    %683 = vmatprep.subr.mxu0 0.0
    %684 = vmatpush2.xpose.msra.mxu0 0.0
    %685 = vmatprep.subr.mxu0 0.0
    %686 = vmatpush2.xpose.msra.mxu0 0.0
    %687 = vmatprep.subr.mxu0 0.0
    %688 = vmatpush2.xpose.msra.mxu0 0.0
    %689 = vmatprep.subr.mxu0 0.0
    %690 = vmatpush2.xpose.msra.mxu0 0.0
    %691 = vmatprep.subr.mxu0 0.0
    %692 = vmatpush2.xpose.msra.mxu0 0.0
    %693 = vmatprep.subr.mxu0 0.0
    %694 = vmatpush2.xpose.msra.mxu0 0.0
    %695 = vmatprep.subr.mxu0 0.0
    %696 = vmatpush2.xpose.msra.mxu0 0.0
    %697 = vmatprep.subr.mxu0 0.0
    %698 = vmatpush2.xpose.msra.mxu0 0.0
    %699 = vmatprep.subr.mxu0 0.0
    %700 = vmatpush2.xpose.msra.mxu0 0.0
    %701 = vmatprep.subr.mxu0 0.0
    %702 = vmatpush2.xpose.msra.mxu0 0.0
    %703 = vmatprep.subr.mxu0 0.0
    %704 = vmatpush2.xpose.msra.mxu0 0.0
    %705 = vmatprep.subr.mxu0 0.0
    %706 = vmatpush2.xpose.msra.mxu0 0.0
    %707 = vmatprep.mubr.f32.mxu0 0.0
    %v708 = vand.u32 %v55, 4294901760
    %709 = vmatmul.mubr.f32.gmra.mxu0 %v708
    %v710 = vpop.f32.mrf.mxu0
    %v711 = vadd.f32 %v624, %v710
    %v712 = vpop.f32.mrf.mxu0
    %713 = vdwg.mxu0
    %v714 = vadd.f32 %v72, %v711
    %715 = vst [vmem:[#allocation2] sm:$0xff] %v714
    // Predicated region
    $region30: #{tpu_custom_call.1} parent=1 // pred_check
      %p716 = pneg %p48
    $region31: #{tpu_custom_call.1} parent=1 // pred_check_branch
      %718 = sbr.rel (%p716) target = $region33
    $region32: #{tpu_custom_call.1} parent=1 // pred_region
      %v719 = vld [vmem:[#allocation3] sm:$0xff]
      %v720 = vmul.f32 %v55, %v55
      %721 = vadd.xlane.f32.xlu0 %v720
      %v722 = vpop.xlane.xlu0 %721
      %v723 = vadd.f32 %v719, %v722
      %vm724 = vcmask 7168
      %725 = vst.msk [vmem:[#allocation3] sm:$0xff] %vm724, %v723
    $region33: #{tpu_custom_call.1} parent=1 // pred_fallthru
      _
    %v726 = vmul.f32 %v56, %v56
    %v727 = vmul.f32 %v57, %v57
    %v728 = vmul.f32 %v58, %v58
    %v729 = vmul.f32 %v59, %v59
    %v730 = vmul.f32 %v60, %v60
    %v731 = vmul.f32 %v61, %v61
    %v732 = vmul.f32 %v62, %v62
    %v733 = vmul.f32 %v63, %v63
    %v734 = vmul.f32 %v64, %v64
    %v735 = vmul.f32 %v65, %v65
    %v736 = vmul.f32 %v66, %v66
    %v737 = vmul.f32 %v67, %v67
    %v738 = vmul.f32 %v68, %v68
    %v739 = vmul.f32 %v69, %v69
    %v740 = vmul.f32 %v70, %v70
    %v741 = vmul.f32 %v71, %v71
    %v742 = vld [vmem:[#allocation4] sm:$0xff]
    %743 = vmatprep.subr.mxu0 0.0
    %v744 = vand.u32 %v741, 4294901760
    %745 = vmatpush1.xpose.msra.mxu0 %v744
    %746 = vmatprep.subr.mxu0 0.0
    %v747 = vand.u32 %v740, 4294901760
    %748 = vmatpush1.xpose.msra.mxu0 %v747
    %749 = vmatprep.subr.mxu0 0.0
    %v750 = vand.u32 %v739, 4294901760
    %751 = vmatpush1.xpose.msra.mxu0 %v750
    %752 = vmatprep.subr.mxu0 0.0
    %v753 = vand.u32 %v738, 4294901760
    %754 = vmatpush1.xpose.msra.mxu0 %v753
    %755 = vmatprep.subr.mxu0 0.0
    %v756 = vand.u32 %v737, 4294901760
    %757 = vmatpush1.xpose.msra.mxu0 %v756
    %758 = vmatprep.subr.mxu0 0.0
    %v759 = vand.u32 %v736, 4294901760
    %760 = vmatpush1.xpose.msra.mxu0 %v759
    %761 = vmatprep.subr.mxu0 0.0
    %v762 = vand.u32 %v735, 4294901760
    %763 = vmatpush1.xpose.msra.mxu0 %v762
    %764 = vmatprep.subr.mxu0 0.0
    %v765 = vand.u32 %v734, 4294901760
    %766 = vmatpush1.xpose.msra.mxu0 %v765
    %767 = vmatprep.subr.mxu0 0.0
    %v768 = vand.u32 %v733, 4294901760
    %769 = vmatpush1.xpose.msra.mxu0 %v768
    %770 = vmatprep.subr.mxu0 0.0
    %v771 = vand.u32 %v732, 4294901760
    %772 = vmatpush1.xpose.msra.mxu0 %v771
    %773 = vmatprep.subr.mxu0 0.0
    %v774 = vand.u32 %v731, 4294901760
    %775 = vmatpush1.xpose.msra.mxu0 %v774
    %776 = vmatprep.subr.mxu0 0.0
    %v777 = vand.u32 %v730, 4294901760
    %778 = vmatpush1.xpose.msra.mxu0 %v777
    %779 = vmatprep.subr.mxu0 0.0
    %v780 = vand.u32 %v729, 4294901760
    %781 = vmatpush1.xpose.msra.mxu0 %v780
    %782 = vmatprep.subr.mxu0 0.0
    %v783 = vand.u32 %v728, 4294901760
    %784 = vmatpush1.xpose.msra.mxu0 %v783
    %785 = vmatprep.subr.mxu0 0.0
    %v786 = vand.u32 %v727, 4294901760
    %787 = vmatpush1.xpose.msra.mxu0 %v786
    %788 = vmatprep.subr.mxu0 0.0
    %v789 = vand.u32 %v726, 4294901760
    %790 = vmatpush1.xpose.msra.mxu0 %v789
    %791 = vmatprep.subr.mxu0 0.0
    %792 = vmatpush2.xpose.msra.mxu0 0.0
    %793 = vmatprep.subr.mxu0 0.0
    %794 = vmatpush2.xpose.msra.mxu0 0.0
    %795 = vmatprep.subr.mxu0 0.0
    %796 = vmatpush2.xpose.msra.mxu0 0.0
    %797 = vmatprep.subr.mxu0 0.0
    %798 = vmatpush2.xpose.msra.mxu0 0.0
    %799 = vmatprep.subr.mxu0 0.0
    %800 = vmatpush2.xpose.msra.mxu0 0.0
    %801 = vmatprep.subr.mxu0 0.0
    %802 = vmatpush2.xpose.msra.mxu0 0.0
    %803 = vmatprep.subr.mxu0 0.0
    %804 = vmatpush2.xpose.msra.mxu0 0.0
    %805 = vmatprep.subr.mxu0 0.0
    %806 = vmatpush2.xpose.msra.mxu0 0.0
    %807 = vmatprep.subr.mxu0 0.0
    %808 = vmatpush2.xpose.msra.mxu0 0.0
    %809 = vmatprep.subr.mxu0 0.0
    %810 = vmatpush2.xpose.msra.mxu0 0.0
    %811 = vmatprep.subr.mxu0 0.0
    %812 = vmatpush2.xpose.msra.mxu0 0.0
    %813 = vmatprep.subr.mxu0 0.0
    %814 = vmatpush2.xpose.msra.mxu0 0.0
    %815 = vmatprep.subr.mxu0 0.0
    %816 = vmatpush2.xpose.msra.mxu0 0.0
    %817 = vmatprep.subr.mxu0 0.0
    %818 = vmatpush2.xpose.msra.mxu0 0.0
    %819 = vmatprep.subr.mxu0 0.0
    %820 = vmatpush2.xpose.msra.mxu0 0.0
    %821 = vmatprep.subr.mxu0 0.0
    %822 = vmatpush2.xpose.msra.mxu0 0.0
    %823 = vmatprep.mubr.f32.mxu0 0.0
    %824 = vmatmul.mubr.f32.gmra.mxu0 0.0
    %v825 = vpop.f32.mrf.mxu0
    %v826 = vadd.f32 0.0, %v825
    %v827 = vpop.f32.mrf.mxu0
    %828 = vdwg.mxu0
    %829 = vmatprep.subr.mxu0 0.0
    %v830 = vand.u32 %v741, 4294901760
    %v831 = vsub.f32 %v741, %v830
    %v832 = vand.u32 %v831, 4294901760
    %v833 = vsub.f32 %v831, %v832
    %v834 = vand.u32 %v833, 4294901760
    %835 = vmatpush1.xpose.msra.mxu0 %v834
    %836 = vmatprep.subr.mxu0 0.0
    %v837 = vand.u32 %v740, 4294901760
    %v838 = vsub.f32 %v740, %v837
    %v839 = vand.u32 %v838, 4294901760
    %v840 = vsub.f32 %v838, %v839
    %v841 = vand.u32 %v840, 4294901760
    %842 = vmatpush1.xpose.msra.mxu0 %v841
    %843 = vmatprep.subr.mxu0 0.0
    %v844 = vand.u32 %v739, 4294901760
    %v845 = vsub.f32 %v739, %v844
    %v846 = vand.u32 %v845, 4294901760
    %v847 = vsub.f32 %v845, %v846
    %v848 = vand.u32 %v847, 4294901760
    %849 = vmatpush1.xpose.msra.mxu0 %v848
    %850 = vmatprep.subr.mxu0 0.0
    %v851 = vand.u32 %v738, 4294901760
    %v852 = vsub.f32 %v738, %v851
    %v853 = vand.u32 %v852, 4294901760
    %v854 = vsub.f32 %v852, %v853
    %v855 = vand.u32 %v854, 4294901760
    %856 = vmatpush1.xpose.msra.mxu0 %v855
    %857 = vmatprep.subr.mxu0 0.0
    %v858 = vand.u32 %v737, 4294901760
    %v859 = vsub.f32 %v737, %v858
    %v860 = vand.u32 %v859, 4294901760
    %v861 = vsub.f32 %v859, %v860
    %v862 = vand.u32 %v861, 4294901760
    %863 = vmatpush1.xpose.msra.mxu0 %v862
    %864 = vmatprep.subr.mxu0 0.0
    %v865 = vand.u32 %v736, 4294901760
    %v866 = vsub.f32 %v736, %v865
    %v867 = vand.u32 %v866, 4294901760
    %v868 = vsub.f32 %v866, %v867
    %v869 = vand.u32 %v868, 4294901760
    %870 = vmatpush1.xpose.msra.mxu0 %v869
    %871 = vmatprep.subr.mxu0 0.0
    %v872 = vand.u32 %v735, 4294901760
    %v873 = vsub.f32 %v735, %v872
    %v874 = vand.u32 %v873, 4294901760
    %v875 = vsub.f32 %v873, %v874
    %v876 = vand.u32 %v875, 4294901760
    %877 = vmatpush1.xpose.msra.mxu0 %v876
    %878 = vmatprep.subr.mxu0 0.0
    %v879 = vand.u32 %v734, 4294901760
    %v880 = vsub.f32 %v734, %v879
    %v881 = vand.u32 %v880, 4294901760
    %v882 = vsub.f32 %v880, %v881
    %v883 = vand.u32 %v882, 4294901760
    %884 = vmatpush1.xpose.msra.mxu0 %v883
    %885 = vmatprep.subr.mxu0 0.0
    %v886 = vand.u32 %v733, 4294901760
    %v887 = vsub.f32 %v733, %v886
    %v888 = vand.u32 %v887, 4294901760
    %v889 = vsub.f32 %v887, %v888
    %v890 = vand.u32 %v889, 4294901760
    %891 = vmatpush1.xpose.msra.mxu0 %v890
    %892 = vmatprep.subr.mxu0 0.0
    %v893 = vand.u32 %v732, 4294901760
    %v894 = vsub.f32 %v732, %v893
    %v895 = vand.u32 %v894, 4294901760
    %v896 = vsub.f32 %v894, %v895
    %v897 = vand.u32 %v896, 4294901760
    %898 = vmatpush1.xpose.msra.mxu0 %v897
    %899 = vmatprep.subr.mxu0 0.0
    %v900 = vand.u32 %v731, 4294901760
    %v901 = vsub.f32 %v731, %v900
    %v902 = vand.u32 %v901, 4294901760
    %v903 = vsub.f32 %v901, %v902
    %v904 = vand.u32 %v903, 4294901760
    %905 = vmatpush1.xpose.msra.mxu0 %v904
    %906 = vmatprep.subr.mxu0 0.0
    %v907 = vand.u32 %v730, 4294901760
    %v908 = vsub.f32 %v730, %v907
    %v909 = vand.u32 %v908, 4294901760
    %v910 = vsub.f32 %v908, %v909
    %v911 = vand.u32 %v910, 4294901760
    %912 = vmatpush1.xpose.msra.mxu0 %v911
    %913 = vmatprep.subr.mxu0 0.0
    %v914 = vand.u32 %v729, 4294901760
    %v915 = vsub.f32 %v729, %v914
    %v916 = vand.u32 %v915, 4294901760
    %v917 = vsub.f32 %v915, %v916
    %v918 = vand.u32 %v917, 4294901760
    %919 = vmatpush1.xpose.msra.mxu0 %v918
    %920 = vmatprep.subr.mxu0 0.0
    %v921 = vand.u32 %v728, 4294901760
    %v922 = vsub.f32 %v728, %v921
    %v923 = vand.u32 %v922, 4294901760
    %v924 = vsub.f32 %v922, %v923
    %v925 = vand.u32 %v924, 4294901760
    %926 = vmatpush1.xpose.msra.mxu0 %v925
    %927 = vmatprep.subr.mxu0 0.0
    %v928 = vand.u32 %v727, 4294901760
    %v929 = vsub.f32 %v727, %v928
    %v930 = vand.u32 %v929, 4294901760
    %v931 = vsub.f32 %v929, %v930
    %v932 = vand.u32 %v931, 4294901760
    %933 = vmatpush1.xpose.msra.mxu0 %v932
    %934 = vmatprep.subr.mxu0 0.0
    %v935 = vand.u32 %v726, 4294901760
    %v936 = vsub.f32 %v726, %v935
    %v937 = vand.u32 %v936, 4294901760
    %v938 = vsub.f32 %v936, %v937
    %v939 = vand.u32 %v938, 4294901760
    %940 = vmatpush1.xpose.msra.mxu0 %v939
    %941 = vmatprep.subr.mxu0 0.0
    %942 = vmatpush2.xpose.msra.mxu0 0.0
    %943 = vmatprep.subr.mxu0 0.0
    %944 = vmatpush2.xpose.msra.mxu0 0.0
    %945 = vmatprep.subr.mxu0 0.0
    %946 = vmatpush2.xpose.msra.mxu0 0.0
    %947 = vmatprep.subr.mxu0 0.0
    %948 = vmatpush2.xpose.msra.mxu0 0.0
    %949 = vmatprep.subr.mxu0 0.0
    %950 = vmatpush2.xpose.msra.mxu0 0.0
    %951 = vmatprep.subr.mxu0 0.0
    %952 = vmatpush2.xpose.msra.mxu0 0.0
    %953 = vmatprep.subr.mxu0 0.0
    %954 = vmatpush2.xpose.msra.mxu0 0.0
    %955 = vmatprep.subr.mxu0 0.0
    %956 = vmatpush2.xpose.msra.mxu0 0.0
    %957 = vmatprep.subr.mxu0 0.0
    %958 = vmatpush2.xpose.msra.mxu0 0.0
    %959 = vmatprep.subr.mxu0 0.0
    %960 = vmatpush2.xpose.msra.mxu0 0.0
    %961 = vmatprep.subr.mxu0 0.0
    %962 = vmatpush2.xpose.msra.mxu0 0.0
    %963 = vmatprep.subr.mxu0 0.0
    %964 = vmatpush2.xpose.msra.mxu0 0.0
    %965 = vmatprep.subr.mxu0 0.0
    %966 = vmatpush2.xpose.msra.mxu0 0.0
    %967 = vmatprep.subr.mxu0 0.0
    %968 = vmatpush2.xpose.msra.mxu0 0.0
    %969 = vmatprep.subr.mxu0 0.0
    %970 = vmatpush2.xpose.msra.mxu0 0.0
    %971 = vmatprep.subr.mxu0 0.0
    %972 = vmatpush2.xpose.msra.mxu0 0.0
    %973 = vmatprep.mubr.f32.mxu0 0.0
    %974 = vmatmul.mubr.f32.gmra.mxu0 1.0
    %v975 = vpop.f32.mrf.mxu0
    %v976 = vadd.f32 %v826, %v975
    %v977 = vpop.f32.mrf.mxu0
    %978 = vdwg.mxu0
    %979 = vmatprep.subr.mxu0 0.0
    %v980 = vand.u32 %v741, 4294901760
    %v981 = vsub.f32 %v741, %v980
    %982 = vmatpush1.xpose.msra.mxu0 %v981
    %983 = vmatprep.subr.mxu0 0.0
    %v984 = vand.u32 %v740, 4294901760
    %v985 = vsub.f32 %v740, %v984
    %986 = vmatpush1.xpose.msra.mxu0 %v985
    %987 = vmatprep.subr.mxu0 0.0
    %v988 = vand.u32 %v739, 4294901760
    %v989 = vsub.f32 %v739, %v988
    %990 = vmatpush1.xpose.msra.mxu0 %v989
    %991 = vmatprep.subr.mxu0 0.0
    %v992 = vand.u32 %v738, 4294901760
    %v993 = vsub.f32 %v738, %v992
    %994 = vmatpush1.xpose.msra.mxu0 %v993
    %995 = vmatprep.subr.mxu0 0.0
    %v996 = vand.u32 %v737, 4294901760
    %v997 = vsub.f32 %v737, %v996
    %998 = vmatpush1.xpose.msra.mxu0 %v997
    %999 = vmatprep.subr.mxu0 0.0
    %v1000 = vand.u32 %v736, 4294901760
    %v1001 = vsub.f32 %v736, %v1000
    %1002 = vmatpush1.xpose.msra.mxu0 %v1001
    %1003 = vmatprep.subr.mxu0 0.0
    %v1004 = vand.u32 %v735, 4294901760
    %v1005 = vsub.f32 %v735, %v1004
    %1006 = vmatpush1.xpose.msra.mxu0 %v1005
    %1007 = vmatprep.subr.mxu0 0.0
    %v1008 = vand.u32 %v734, 4294901760
    %v1009 = vsub.f32 %v734, %v1008
    %1010 = vmatpush1.xpose.msra.mxu0 %v1009
    %1011 = vmatprep.subr.mxu0 0.0
    %v1012 = vand.u32 %v733, 4294901760
    %v1013 = vsub.f32 %v733, %v1012
    %1014 = vmatpush1.xpose.msra.mxu0 %v1013
    %1015 = vmatprep.subr.mxu0 0.0
    %v1016 = vand.u32 %v732, 4294901760
    %v1017 = vsub.f32 %v732, %v1016
    %1018 = vmatpush1.xpose.msra.mxu0 %v1017
    %1019 = vmatprep.subr.mxu0 0.0
    %v1020 = vand.u32 %v731, 4294901760
    %v1021 = vsub.f32 %v731, %v1020
    %1022 = vmatpush1.xpose.msra.mxu0 %v1021
    %1023 = vmatprep.subr.mxu0 0.0
    %v1024 = vand.u32 %v730, 4294901760
    %v1025 = vsub.f32 %v730, %v1024
    %1026 = vmatpush1.xpose.msra.mxu0 %v1025
    %1027 = vmatprep.subr.mxu0 0.0
    %v1028 = vand.u32 %v729, 4294901760
    %v1029 = vsub.f32 %v729, %v1028
    %1030 = vmatpush1.xpose.msra.mxu0 %v1029
    %1031 = vmatprep.subr.mxu0 0.0
    %v1032 = vand.u32 %v728, 4294901760
    %v1033 = vsub.f32 %v728, %v1032
    %1034 = vmatpush1.xpose.msra.mxu0 %v1033
    %1035 = vmatprep.subr.mxu0 0.0
    %v1036 = vand.u32 %v727, 4294901760
    %v1037 = vsub.f32 %v727, %v1036
    %1038 = vmatpush1.xpose.msra.mxu0 %v1037
    %1039 = vmatprep.subr.mxu0 0.0
    %v1040 = vand.u32 %v726, 4294901760
    %v1041 = vsub.f32 %v726, %v1040
    %1042 = vmatpush1.xpose.msra.mxu0 %v1041
    %1043 = vmatprep.subr.mxu0 0.0
    %1044 = vmatpush2.xpose.msra.mxu0 0.0
    %1045 = vmatprep.subr.mxu0 0.0
    %1046 = vmatpush2.xpose.msra.mxu0 0.0
    %1047 = vmatprep.subr.mxu0 0.0
    %1048 = vmatpush2.xpose.msra.mxu0 0.0
    %1049 = vmatprep.subr.mxu0 0.0
    %1050 = vmatpush2.xpose.msra.mxu0 0.0
    %1051 = vmatprep.subr.mxu0 0.0
    %1052 = vmatpush2.xpose.msra.mxu0 0.0
    %1053 = vmatprep.subr.mxu0 0.0
    %1054 = vmatpush2.xpose.msra.mxu0 0.0
    %1055 = vmatprep.subr.mxu0 0.0
    %1056 = vmatpush2.xpose.msra.mxu0 0.0
    %1057 = vmatprep.subr.mxu0 0.0
    %1058 = vmatpush2.xpose.msra.mxu0 0.0
    %1059 = vmatprep.subr.mxu0 0.0
    %1060 = vmatpush2.xpose.msra.mxu0 0.0
    %1061 = vmatprep.subr.mxu0 0.0
    %1062 = vmatpush2.xpose.msra.mxu0 0.0
    %1063 = vmatprep.subr.mxu0 0.0
    %1064 = vmatpush2.xpose.msra.mxu0 0.0
    %1065 = vmatprep.subr.mxu0 0.0
    %1066 = vmatpush2.xpose.msra.mxu0 0.0
    %1067 = vmatprep.subr.mxu0 0.0
    %1068 = vmatpush2.xpose.msra.mxu0 0.0
    %1069 = vmatprep.subr.mxu0 0.0
    %1070 = vmatpush2.xpose.msra.mxu0 0.0
    %1071 = vmatprep.subr.mxu0 0.0
    %1072 = vmatpush2.xpose.msra.mxu0 0.0
    %1073 = vmatprep.subr.mxu0 0.0
    %1074 = vmatpush2.xpose.msra.mxu0 0.0
    %1075 = vmatprep.mubr.f32.mxu0 0.0
    %1076 = vmatmul.mubr.f32.gmra.mxu0 0.0
    %v1077 = vpop.f32.mrf.mxu0
    %v1078 = vadd.f32 %v976, %v1077
    %v1079 = vpop.f32.mrf.mxu0
    %1080 = vdwg.mxu0
    %1081 = vmatprep.subr.mxu0 0.0
    %v1082 = vand.u32 %v741, 4294901760
    %1083 = vmatpush1.xpose.msra.mxu0 %v1082
    %1084 = vmatprep.subr.mxu0 0.0
    %v1085 = vand.u32 %v740, 4294901760
    %1086 = vmatpush1.xpose.msra.mxu0 %v1085
    %1087 = vmatprep.subr.mxu0 0.0
    %v1088 = vand.u32 %v739, 4294901760
    %1089 = vmatpush1.xpose.msra.mxu0 %v1088
    %1090 = vmatprep.subr.mxu0 0.0
    %v1091 = vand.u32 %v738, 4294901760
    %1092 = vmatpush1.xpose.msra.mxu0 %v1091
    %1093 = vmatprep.subr.mxu0 0.0
    %v1094 = vand.u32 %v737, 4294901760
    %1095 = vmatpush1.xpose.msra.mxu0 %v1094
    %1096 = vmatprep.subr.mxu0 0.0
    %v1097 = vand.u32 %v736, 4294901760
    %1098 = vmatpush1.xpose.msra.mxu0 %v1097
    %1099 = vmatprep.subr.mxu0 0.0
    %v1100 = vand.u32 %v735, 4294901760
    %1101 = vmatpush1.xpose.msra.mxu0 %v1100
    %1102 = vmatprep.subr.mxu0 0.0
    %v1103 = vand.u32 %v734, 4294901760
    %1104 = vmatpush1.xpose.msra.mxu0 %v1103
    %1105 = vmatprep.subr.mxu0 0.0
    %v1106 = vand.u32 %v733, 4294901760
    %1107 = vmatpush1.xpose.msra.mxu0 %v1106
    %1108 = vmatprep.subr.mxu0 0.0
    %v1109 = vand.u32 %v732, 4294901760
    %1110 = vmatpush1.xpose.msra.mxu0 %v1109
    %1111 = vmatprep.subr.mxu0 0.0
    %v1112 = vand.u32 %v731, 4294901760
    %1113 = vmatpush1.xpose.msra.mxu0 %v1112
    %1114 = vmatprep.subr.mxu0 0.0
    %v1115 = vand.u32 %v730, 4294901760
    %1116 = vmatpush1.xpose.msra.mxu0 %v1115
    %1117 = vmatprep.subr.mxu0 0.0
    %v1118 = vand.u32 %v729, 4294901760
    %1119 = vmatpush1.xpose.msra.mxu0 %v1118
    %1120 = vmatprep.subr.mxu0 0.0
    %v1121 = vand.u32 %v728, 4294901760
    %1122 = vmatpush1.xpose.msra.mxu0 %v1121
    %1123 = vmatprep.subr.mxu0 0.0
    %v1124 = vand.u32 %v727, 4294901760
    %1125 = vmatpush1.xpose.msra.mxu0 %v1124
    %1126 = vmatprep.subr.mxu0 0.0
    %v1127 = vand.u32 %v726, 4294901760
    %1128 = vmatpush1.xpose.msra.mxu0 %v1127
    %1129 = vmatprep.subr.mxu0 0.0
    %1130 = vmatpush2.xpose.msra.mxu0 0.0
    %1131 = vmatprep.subr.mxu0 0.0
    %1132 = vmatpush2.xpose.msra.mxu0 0.0
    %1133 = vmatprep.subr.mxu0 0.0
    %1134 = vmatpush2.xpose.msra.mxu0 0.0
    %1135 = vmatprep.subr.mxu0 0.0
    %1136 = vmatpush2.xpose.msra.mxu0 0.0
    %1137 = vmatprep.subr.mxu0 0.0
    %1138 = vmatpush2.xpose.msra.mxu0 0.0
    %1139 = vmatprep.subr.mxu0 0.0
    %1140 = vmatpush2.xpose.msra.mxu0 0.0
    %1141 = vmatprep.subr.mxu0 0.0
    %1142 = vmatpush2.xpose.msra.mxu0 0.0
    %1143 = vmatprep.subr.mxu0 0.0
    %1144 = vmatpush2.xpose.msra.mxu0 0.0
    %1145 = vmatprep.subr.mxu0 0.0
    %1146 = vmatpush2.xpose.msra.mxu0 0.0
    %1147 = vmatprep.subr.mxu0 0.0
    %1148 = vmatpush2.xpose.msra.mxu0 0.0
    %1149 = vmatprep.subr.mxu0 0.0
    %1150 = vmatpush2.xpose.msra.mxu0 0.0
    %1151 = vmatprep.subr.mxu0 0.0
    %1152 = vmatpush2.xpose.msra.mxu0 0.0
    %1153 = vmatprep.subr.mxu0 0.0
    %1154 = vmatpush2.xpose.msra.mxu0 0.0
    %1155 = vmatprep.subr.mxu0 0.0
    %1156 = vmatpush2.xpose.msra.mxu0 0.0
    %1157 = vmatprep.subr.mxu0 0.0
    %1158 = vmatpush2.xpose.msra.mxu0 0.0
    %1159 = vmatprep.subr.mxu0 0.0
    %1160 = vmatpush2.xpose.msra.mxu0 0.0
    %1161 = vmatprep.mubr.f32.mxu0 0.0
    %1162 = vmatmul.mubr.f32.gmra.mxu0 0.0
    %v1163 = vpop.f32.mrf.mxu0
    %v1164 = vadd.f32 %v1078, %v1163
    %v1165 = vpop.f32.mrf.mxu0
    %1166 = vdwg.mxu0
    %1167 = vmatprep.subr.mxu0 0.0
    %v1168 = vand.u32 %v741, 4294901760
    %v1169 = vsub.f32 %v741, %v1168
    %v1170 = vand.u32 %v1169, 4294901760
    %1171 = vmatpush1.xpose.msra.mxu0 %v1170
    %1172 = vmatprep.subr.mxu0 0.0
    %v1173 = vand.u32 %v740, 4294901760
    %v1174 = vsub.f32 %v740, %v1173
    %v1175 = vand.u32 %v1174, 4294901760
    %1176 = vmatpush1.xpose.msra.mxu0 %v1175
    %1177 = vmatprep.subr.mxu0 0.0
    %v1178 = vand.u32 %v739, 4294901760
    %v1179 = vsub.f32 %v739, %v1178
    %v1180 = vand.u32 %v1179, 4294901760
    %1181 = vmatpush1.xpose.msra.mxu0 %v1180
    %1182 = vmatprep.subr.mxu0 0.0
    %v1183 = vand.u32 %v738, 4294901760
    %v1184 = vsub.f32 %v738, %v1183
    %v1185 = vand.u32 %v1184, 4294901760
    %1186 = vmatpush1.xpose.msra.mxu0 %v1185
    %1187 = vmatprep.subr.mxu0 0.0
    %v1188 = vand.u32 %v737, 4294901760
    %v1189 = vsub.f32 %v737, %v1188
    %v1190 = vand.u32 %v1189, 4294901760
    %1191 = vmatpush1.xpose.msra.mxu0 %v1190
    %1192 = vmatprep.subr.mxu0 0.0
    %v1193 = vand.u32 %v736, 4294901760
    %v1194 = vsub.f32 %v736, %v1193
    %v1195 = vand.u32 %v1194, 4294901760
    %1196 = vmatpush1.xpose.msra.mxu0 %v1195
    %1197 = vmatprep.subr.mxu0 0.0
    %v1198 = vand.u32 %v735, 4294901760
    %v1199 = vsub.f32 %v735, %v1198
    %v1200 = vand.u32 %v1199, 4294901760
    %1201 = vmatpush1.xpose.msra.mxu0 %v1200
    %1202 = vmatprep.subr.mxu0 0.0
    %v1203 = vand.u32 %v734, 4294901760
    %v1204 = vsub.f32 %v734, %v1203
    %v1205 = vand.u32 %v1204, 4294901760
    %1206 = vmatpush1.xpose.msra.mxu0 %v1205
    %1207 = vmatprep.subr.mxu0 0.0
    %v1208 = vand.u32 %v733, 4294901760
    %v1209 = vsub.f32 %v733, %v1208
    %v1210 = vand.u32 %v1209, 4294901760
    %1211 = vmatpush1.xpose.msra.mxu0 %v1210
    %1212 = vmatprep.subr.mxu0 0.0
    %v1213 = vand.u32 %v732, 4294901760
    %v1214 = vsub.f32 %v732, %v1213
    %v1215 = vand.u32 %v1214, 4294901760
    %1216 = vmatpush1.xpose.msra.mxu0 %v1215
    %1217 = vmatprep.subr.mxu0 0.0
    %v1218 = vand.u32 %v731, 4294901760
    %v1219 = vsub.f32 %v731, %v1218
    %v1220 = vand.u32 %v1219, 4294901760
    %1221 = vmatpush1.xpose.msra.mxu0 %v1220
    %1222 = vmatprep.subr.mxu0 0.0
    %v1223 = vand.u32 %v730, 4294901760
    %v1224 = vsub.f32 %v730, %v1223
    %v1225 = vand.u32 %v1224, 4294901760
    %1226 = vmatpush1.xpose.msra.mxu0 %v1225
    %1227 = vmatprep.subr.mxu0 0.0
    %v1228 = vand.u32 %v729, 4294901760
    %v1229 = vsub.f32 %v729, %v1228
    %v1230 = vand.u32 %v1229, 4294901760
    %1231 = vmatpush1.xpose.msra.mxu0 %v1230
    %1232 = vmatprep.subr.mxu0 0.0
    %v1233 = vand.u32 %v728, 4294901760
    %v1234 = vsub.f32 %v728, %v1233
    %v1235 = vand.u32 %v1234, 4294901760
    %1236 = vmatpush1.xpose.msra.mxu0 %v1235
    %1237 = vmatprep.subr.mxu0 0.0
    %v1238 = vand.u32 %v727, 4294901760
    %v1239 = vsub.f32 %v727, %v1238
    %v1240 = vand.u32 %v1239, 4294901760
    %1241 = vmatpush1.xpose.msra.mxu0 %v1240
    %1242 = vmatprep.subr.mxu0 0.0
    %v1243 = vand.u32 %v726, 4294901760
    %v1244 = vsub.f32 %v726, %v1243
    %v1245 = vand.u32 %v1244, 4294901760
    %1246 = vmatpush1.xpose.msra.mxu0 %v1245
    %1247 = vmatprep.subr.mxu0 0.0
    %1248 = vmatpush2.xpose.msra.mxu0 0.0
    %1249 = vmatprep.subr.mxu0 0.0
    %1250 = vmatpush2.xpose.msra.mxu0 0.0
    %1251 = vmatprep.subr.mxu0 0.0
    %1252 = vmatpush2.xpose.msra.mxu0 0.0
    %1253 = vmatprep.subr.mxu0 0.0
    %1254 = vmatpush2.xpose.msra.mxu0 0.0
    %1255 = vmatprep.subr.mxu0 0.0
    %1256 = vmatpush2.xpose.msra.mxu0 0.0
    %1257 = vmatprep.subr.mxu0 0.0
    %1258 = vmatpush2.xpose.msra.mxu0 0.0
    %1259 = vmatprep.subr.mxu0 0.0
    %1260 = vmatpush2.xpose.msra.mxu0 0.0
    %1261 = vmatprep.subr.mxu0 0.0
    %1262 = vmatpush2.xpose.msra.mxu0 0.0
    %1263 = vmatprep.subr.mxu0 0.0
    %1264 = vmatpush2.xpose.msra.mxu0 0.0
    %1265 = vmatprep.subr.mxu0 0.0
    %1266 = vmatpush2.xpose.msra.mxu0 0.0
    %1267 = vmatprep.subr.mxu0 0.0
    %1268 = vmatpush2.xpose.msra.mxu0 0.0
    %1269 = vmatprep.subr.mxu0 0.0
    %1270 = vmatpush2.xpose.msra.mxu0 0.0
    %1271 = vmatprep.subr.mxu0 0.0
    %1272 = vmatpush2.xpose.msra.mxu0 0.0
    %1273 = vmatprep.subr.mxu0 0.0
    %1274 = vmatpush2.xpose.msra.mxu0 0.0
    %1275 = vmatprep.subr.mxu0 0.0
    %1276 = vmatpush2.xpose.msra.mxu0 0.0
    %1277 = vmatprep.subr.mxu0 0.0
    %1278 = vmatpush2.xpose.msra.mxu0 0.0
    %1279 = vmatprep.mubr.f32.mxu0 0.0
    %1280 = vmatmul.mubr.f32.gmra.mxu0 1.0
    %v1281 = vpop.f32.mrf.mxu0
    %v1282 = vadd.f32 %v1164, %v1281
    %v1283 = vpop.f32.mrf.mxu0
    %1284 = vdwg.mxu0
    %1285 = vmatprep.subr.mxu0 0.0
    %v1286 = vand.u32 %v741, 4294901760
    %1287 = vmatpush1.xpose.msra.mxu0 %v1286
    %1288 = vmatprep.subr.mxu0 0.0
    %v1289 = vand.u32 %v740, 4294901760
    %1290 = vmatpush1.xpose.msra.mxu0 %v1289
    %1291 = vmatprep.subr.mxu0 0.0
    %v1292 = vand.u32 %v739, 4294901760
    %1293 = vmatpush1.xpose.msra.mxu0 %v1292
    %1294 = vmatprep.subr.mxu0 0.0
    %v1295 = vand.u32 %v738, 4294901760
    %1296 = vmatpush1.xpose.msra.mxu0 %v1295
    %1297 = vmatprep.subr.mxu0 0.0
    %v1298 = vand.u32 %v737, 4294901760
    %1299 = vmatpush1.xpose.msra.mxu0 %v1298
    %1300 = vmatprep.subr.mxu0 0.0
    %v1301 = vand.u32 %v736, 4294901760
    %1302 = vmatpush1.xpose.msra.mxu0 %v1301
    %1303 = vmatprep.subr.mxu0 0.0
    %v1304 = vand.u32 %v735, 4294901760
    %1305 = vmatpush1.xpose.msra.mxu0 %v1304
    %1306 = vmatprep.subr.mxu0 0.0
    %v1307 = vand.u32 %v734, 4294901760
    %1308 = vmatpush1.xpose.msra.mxu0 %v1307
    %1309 = vmatprep.subr.mxu0 0.0
    %v1310 = vand.u32 %v733, 4294901760
    %1311 = vmatpush1.xpose.msra.mxu0 %v1310
    %1312 = vmatprep.subr.mxu0 0.0
    %v1313 = vand.u32 %v732, 4294901760
    %1314 = vmatpush1.xpose.msra.mxu0 %v1313
    %1315 = vmatprep.subr.mxu0 0.0
    %v1316 = vand.u32 %v731, 4294901760
    %1317 = vmatpush1.xpose.msra.mxu0 %v1316
    %1318 = vmatprep.subr.mxu0 0.0
    %v1319 = vand.u32 %v730, 4294901760
    %1320 = vmatpush1.xpose.msra.mxu0 %v1319
    %1321 = vmatprep.subr.mxu0 0.0
    %v1322 = vand.u32 %v729, 4294901760
    %1323 = vmatpush1.xpose.msra.mxu0 %v1322
    %1324 = vmatprep.subr.mxu0 0.0
    %v1325 = vand.u32 %v728, 4294901760
    %1326 = vmatpush1.xpose.msra.mxu0 %v1325
    %1327 = vmatprep.subr.mxu0 0.0
    %v1328 = vand.u32 %v727, 4294901760
    %1329 = vmatpush1.xpose.msra.mxu0 %v1328
    %1330 = vmatprep.subr.mxu0 0.0
    %v1331 = vand.u32 %v726, 4294901760
    %1332 = vmatpush1.xpose.msra.mxu0 %v1331
    %1333 = vmatprep.subr.mxu0 0.0
    %1334 = vmatpush2.xpose.msra.mxu0 0.0
    %1335 = vmatprep.subr.mxu0 0.0
    %1336 = vmatpush2.xpose.msra.mxu0 0.0
    %1337 = vmatprep.subr.mxu0 0.0
    %1338 = vmatpush2.xpose.msra.mxu0 0.0
    %1339 = vmatprep.subr.mxu0 0.0
    %1340 = vmatpush2.xpose.msra.mxu0 0.0
    %1341 = vmatprep.subr.mxu0 0.0
    %1342 = vmatpush2.xpose.msra.mxu0 0.0
    %1343 = vmatprep.subr.mxu0 0.0
    %1344 = vmatpush2.xpose.msra.mxu0 0.0
    %1345 = vmatprep.subr.mxu0 0.0
    %1346 = vmatpush2.xpose.msra.mxu0 0.0
    %1347 = vmatprep.subr.mxu0 0.0
    %1348 = vmatpush2.xpose.msra.mxu0 0.0
    %1349 = vmatprep.subr.mxu0 0.0
    %1350 = vmatpush2.xpose.msra.mxu0 0.0
    %1351 = vmatprep.subr.mxu0 0.0
    %1352 = vmatpush2.xpose.msra.mxu0 0.0
    %1353 = vmatprep.subr.mxu0 0.0
    %1354 = vmatpush2.xpose.msra.mxu0 0.0
    %1355 = vmatprep.subr.mxu0 0.0
    %1356 = vmatpush2.xpose.msra.mxu0 0.0
    %1357 = vmatprep.subr.mxu0 0.0
    %1358 = vmatpush2.xpose.msra.mxu0 0.0
    %1359 = vmatprep.subr.mxu0 0.0
    %1360 = vmatpush2.xpose.msra.mxu0 0.0
    %1361 = vmatprep.subr.mxu0 0.0
    %1362 = vmatpush2.xpose.msra.mxu0 0.0
    %1363 = vmatprep.subr.mxu0 0.0
    %1364 = vmatpush2.xpose.msra.mxu0 0.0
    %1365 = vmatprep.mubr.f32.mxu0 0.0
    %1366 = vmatmul.mubr.f32.gmra.mxu0 1.0
    %v1367 = vpop.f32.mrf.mxu0
    %v1368 = vadd.f32 %v1282, %v1367
    %v1369 = vpop.f32.mrf.mxu0
    %1370 = vdwg.mxu0
    %v1371 = vadd.f32 %v742, %v1368
    %1372 = vst [vmem:[#allocation4] sm:$0xff] %v1371
    // Predicated region
    $region34: #{tpu_custom_call.1} parent=1 // pred_check
      %p1373 = pneg %p42
    $region35: #{tpu_custom_call.1} parent=1 // pred_check_branch
      %1375 = sbr.rel (%p1373) target = $region37
    $region36: #{tpu_custom_call.1} parent=1 // pred_region
      %v1376 = vld [vmem:[#allocation3] sm:$0xff]
      %v1377 = vmax.f32 %v1376, 1e-24
      %v1378 = vrsqrt.pop %v1377
      %v1379 = vld [vmem:[#allocation4] sm:$0x1]
      %v1380 = vmax.f32 %v1379, 1e-24
      %v1381 = vrsqrt.pop %v1380
      %s1382 = sld [smem:[#allocation5]]
      %v1383 = vstv %s1382
      %v1384 = vmul.f32 %v1378, %v1383
      %v1385 = vld [vmem:[#allocation2] sm:$0xff]
      %1387 = vset.pattern.permute.xlu0 0
      %1388 = vperm.xlu0 %1387, %v1384
      %v1389 = vpop.permute.xlu0 %1388
      %v1391 = vmul.f32 %v1385, %v1389
      %v1392 = vlaneseq
      %v1393 = vshrl.u32 %v1392, 7
      %v1394 = vsub.s32 0, %v1393
      %v1395 = vrot.slane %v1381, %v1394
      %v1396 = vmul.f32 %v1391, %v1395
      %1397 = vst [vmem:[#allocation11] sm:$0xff] %v1396
    $region37: #{tpu_custom_call.1} parent=1 // pred_fallthru
      _
    // Predicated region
    $region38: #{tpu_custom_call.1} parent=1 // pred_check
      _
    $region39: #{tpu_custom_call.1} parent=1 // pred_check_branch
      %1399 = sbr.rel (0) target = $region41
    $region40: #{tpu_custom_call.1} parent=1 // pred_region
      %s1401 = ssub.s32 128, 128
      %1402 = vsyncadd [#allocation8], %s1401
      %s1404 = sshll.u32 [#allocation11], 4
      %s1405 = int_to_ptr.vmem [resolvable:$true] %s1404
      %1407 = dma.vmem_to_hbm [thread:$0]  %s1405, 128, %s3, [#allocation8]
    $region41: #{tpu_custom_call.1} parent=1 // pred_fallthru
      _
    // Predicated region
    $region42: #{tpu_custom_call.1} parent=1 // pred_check
      _
    $region43: #{tpu_custom_call.1} parent=1 // pred_check_branch
      %1409 = sbr.rel (0) target = $region45
    $region44: #{tpu_custom_call.1} parent=1 // pred_region
      %1410 = dma.done [#allocation8], 128
    $region45: #{tpu_custom_call.1} parent=1 // pred_fallthru
      _
    %1411 = vsyncpa [#allocation7], 1
    %1412 = vsyncpa [#allocation10], 1
    %1413 = vsyncpa [#allocation8], 1

</llo_original>
